<compile_context>
chip_gen: v6e
topology: v6e:2x2x1
jax: 0.10.0
libtpu: 0.0.40
codegen_flags: <defaults>
</compile_context>

<pallas_src>
import jax
import jax.numpy as jnp
from jax.experimental import pallas as pl
from jax.experimental.pallas import tpu as pltpu

NB_FEATURES = 2048
L = 256
D = 256


# ---------------------------------------------------------------------------
# Packed layout for the small f32 bias / width-1 projection rows: one
# lane-aligned (1, _BIAS_TOTAL) f32 operand instead of ten tiny ones.
# ---------------------------------------------------------------------------
def _bias_layout():
    names = ("b1", "bvu", "wa", "ba", "b2", "b3", "wc", "bc", "bd1", "bd2")
    sizes = (L, 2 * D, D, 1, 128, 64, 64, 1, 32, 5)
    offs, cur = {}, 0
    for n, s in zip(names, sizes):
        offs[n] = cur
        cur += s + ((-s) % 128)          # keep every segment 128-lane aligned
    return offs, dict(zip(names, sizes)), cur


_BIAS_OFF, _BIAS_SIZE, _BIAS_TOTAL = _bias_layout()


def _bias(ref, name):
    off = _BIAS_OFF[name]
    return ref[:, off:off + _BIAS_SIZE[name]]      # (1, size) f32, static slice


def _make_kernel(TB, N):
    F = NB_FEATURES

    def kernel(
        x_ref,            # (TB, N, F) f32   (cast to bf16 in-kernel)
        w1_ref,           # (F, L)    bf16   fc1
        wvu_ref,          # (L, 2D)   bf16   attention_V | attention_U fused
        w2_ref,           # (L, 128)  bf16   fc2
        w3_ref,           # (128, 64) bf16   fc3
        wd1_ref,          # (64, 32)  bf16   center_classifier[0]
        wd2_ref,          # (32, 5)   bf16   center_classifier[2]
        bias_ref,         # (1, _BIAS_TOTAL) f32 packed biases + width-1 rows
        att_ref,          # out: (TB, N) f32
        packed_ref,       # out: (TB, 8) f32  [y_prob, y_hat, pc0..pc4, 0]
    ):
        # f32 -> bf16 cast of x is a cheap VPU pass hidden under the MXU work.
        x2 = x_ref[...].reshape(TB * N, F).astype(jnp.bfloat16)

        # fc1 (MXU, f32 accumulate)
        h = jnp.dot(x2, w1_ref[...],
                    preferred_element_type=jnp.float32) + _bias(bias_ref, "b1")

        # fused gated-attention V|U: one MXU push instead of two
        vu = jnp.dot(h.astype(jnp.bfloat16), wvu_ref[...],
                     preferred_element_type=jnp.float32) + _bias(bias_ref, "bvu")
        g = jnp.tanh(vu[:, :D]) * jax.nn.sigmoid(vu[:, D:])      # (TB*N, D) f32

        # attention logits: width-1 matmul -> VPU multiply + lane reduce (XLU)
        g3 = g.reshape(TB, N, D)
        logits = (jnp.sum(g3 * _bias(bias_ref, "wa"), axis=-1)
                  + _bias(bias_ref, "ba"))                        # (TB, N)

        # per-bag softmax over instances
        l_max = jnp.max(logits, axis=-1, keepdims=True)
        e = jnp.exp(logits - l_max)
        att = e / jnp.sum(e, axis=-1, keepdims=True)              # (TB, N)

        # weighted pool M = A @ h, per bag (VPU mul + sublane reduce)
        h3 = h.reshape(TB, N, L)
        m = jnp.sum(att[:, :, None] * h3, axis=1)                 # (TB, L) f32

        m = jnp.tanh(jnp.dot(m.astype(jnp.bfloat16), w2_ref[...],
                             preferred_element_type=jnp.float32)
                     + _bias(bias_ref, "b2"))                     # (TB, 128)
        m = jnp.tanh(jnp.dot(m.astype(jnp.bfloat16), w3_ref[...],
                             preferred_element_type=jnp.float32)
                     + _bias(bias_ref, "b3"))                     # (TB, 64)

        # classifier: width-1 -> VPU reduce instead of a near-empty MXU push
        y_logit = (jnp.sum(m * _bias(bias_ref, "wc"), axis=-1, keepdims=True)
                   + _bias(bias_ref, "bc"))                       # (TB, 1)
        y_prob = jax.nn.sigmoid(y_logit)
        y_hat = (y_prob >= 0.5).astype(jnp.float32)

        # center classifier (GradReverse is identity in the forward pass)
        c = jnp.tanh(jnp.dot(m.astype(jnp.bfloat16), wd1_ref[...],
                             preferred_element_type=jnp.float32)
                     + _bias(bias_ref, "bd1"))                    # (TB, 32)
        c_logits = jnp.dot(c.astype(jnp.bfloat16), wd2_ref[...],
                           preferred_element_type=jnp.float32) + _bias(bias_ref, "bd2")
        c_max = jnp.max(c_logits, axis=-1, keepdims=True)
        ce = jnp.exp(c_logits - c_max)
        prob_center = ce / jnp.sum(ce, axis=-1, keepdims=True)    # (TB, 5)

        # epilogue: one lane-dense attention store + ONE full packed store
        att_ref[...] = att
        packed_ref[...] = jnp.concatenate(
            [y_prob, y_hat, prob_center, jnp.zeros_like(y_prob)], axis=-1)

    return kernel


def _choose_tb(B, N):
    """Bags per grid step: target 512-1024 M-rows, TB multiple of 8, grid >= 2."""
    target_rows = 512                       # safe for v7x (64 MiB VMEM, f32 x)
    try:
        if pltpu.get_tpu_info().vmem_capacity_bytes >= (96 << 20):
            target_rows = 1024              # v5e / v6e (128 MiB VMEM)
    except Exception:
        pass
    tb = max(1, min(B, target_rows // max(N, 1)))
    if tb >= 8:
        tb = (tb // 8) * 8                  # sublane-aligned rows, full MXU tiles
    # keep >= 2 grid steps for v7x's two TensorCores when B is moderate
    if tb == B and B >= 16:
        tb = max(8, ((B // 2) // 8) * 8)
    return tb


@jax.jit
def gated_attention_forward(x, params, constant):
    """x: (B, N, 2048) f32; params: 18 arrays (Linear weights stored (in, out))."""
    del constant  # only affects GradReverse's backward pass
    (w1, b1, wv, bv, wu, bu, wa, ba, w2, b2, w3, b3,
     wc, bc, wd1, bd1, wd2, bd2) = params
    B, N, F = x.shape
    assert F == NB_FEATURES

    TB = _choose_tb(B, N)
    grid = (pl.cdiv(B, TB),)

    bf = lambda w: w.astype(jnp.bfloat16)
    f32 = lambda b: b.astype(jnp.float32)

    # bf16 MXU weights (fused V|U) + one packed f32 operand for biases / rows
    wvu = jnp.concatenate([bf(wv), bf(wu)], axis=1)               # (L, 2D)
    bias_pieces = {
        "b1": f32(b1),
        "bvu": jnp.concatenate([f32(bv), f32(bu)], axis=1),
        "wa": f32(wa).T, "ba": f32(ba),
        "b2": f32(b2), "b3": f32(b3),
        "wc": f32(wc).T, "bc": f32(bc),
        "bd1": f32(bd1), "bd2": f32(bd2),
    }
    bias_packed = jnp.zeros((1, _BIAS_TOTAL), jnp.float32)
    for n, r in bias_pieces.items():
        bias_packed = bias_packed.at[
            :, _BIAS_OFF[n]:_BIAS_OFF[n] + _BIAS_SIZE[n]].set(r)

    kparams = [bf(w1), wvu, bf(w2), bf(w3), bf(wd1), bf(wd2), bias_packed]

    def _const_spec(shape):
        nd = len(shape)
        return pl.BlockSpec(shape, lambda i, _nd=nd: (0,) * _nd)

    in_specs = [pl.BlockSpec((TB, N, F), lambda i: (i, 0, 0))]     # x, f32
    in_specs += [_const_spec(tuple(p.shape)) for p in kparams]

    out_shape = (
        jax.ShapeDtypeStruct((B, N), jnp.float32),   # attention (lane-dense)
        jax.ShapeDtypeStruct((B, 8), jnp.float32),   # [y_prob, y_hat, pc0..4, 0]
    )
    out_specs = (
        pl.BlockSpec((TB, N), lambda i: (i, 0)),
        pl.BlockSpec((TB, 8), lambda i: (i, 0)),
    )

    # rough cost hint so XLA can schedule around the call
    flops = (2 * B * N * (F * L + L * 2 * D + D)
             + 2 * B * (L * 128 + 128 * 64 + 64 + 64 * 32 + 32 * 5))
    transcendentals = B * N * (2 * D + 1) + B * (128 + 64 + 1 + 32 + 5 + N)
    bytes_accessed = (x.size * 4
                      + sum(int(p.size) * p.dtype.itemsize for p in kparams)
                      + B * (N + 8) * 4)

    att, packed = pl.pallas_call(
        _make_kernel(TB, N),
        out_shape=out_shape,
        grid_spec=pltpu.PrefetchScalarGridSpec(
            num_scalar_prefetch=0,
            grid=grid,
            in_specs=in_specs,
            out_specs=out_specs,
        ),
        compiler_params=pltpu.CompilerParams(
            dimension_semantics=("parallel",),
            vmem_limit_bytes=48 * 1024 * 1024,
        ),
        cost_estimate=pl.CostEstimate(
            flops=flops,
            transcendentals=transcendentals,
            bytes_accessed=bytes_accessed,
        ),
    )(x.astype(jnp.float32), *kparams)

    Y_prob = packed[:, 0:1]
    Y_hat = packed[:, 1:2]
    A = att.reshape(B, 1, N)          # == torch.transpose(A, 1, 2) of column form
    prob_center = packed[:, 2:7]
    return Y_prob, Y_hat, A, prob_center


def _init_params(key):
    """Deterministic synthetic parameters. Linear weight stored (in, out)."""
    dims = [
        (NB_FEATURES, L),  # fc1
        (L, D),            # attention_V
        (L, D),            # attention_U
        (D, 1),            # attention_weights
        (L, 128),          # fc2
        (128, 64),         # fc3
        (64, 1),           # classifier
        (64, 32),          # center_classifier[0]
        (32, 5),           # center_classifier[2]
    ]
    params = []
    for (fin, fout) in dims:
        key, kw, kb = jax.random.split(key, 3)
        scale = 1.0 / jnp.sqrt(jnp.float32(fin))
        w = jax.random.normal(kw, (fin, fout), jnp.float32) * scale
        b = jax.random.normal(kb, (1, fout), jnp.float32) * 0.01
        params += [w, b]
    return params


def _ref_forward(x, params):
    """Pure-JAX f32 reference mirroring the PyTorch forward."""
    (w1, b1, wv, bv, wu, bu, wa, ba, w2, b2, w3, b3,
     wc, bc, wd1, bd1, wd2, bd2) = params
    h = x @ w1 + b1
    a_v = jnp.tanh(h @ wv + bv)
    a_u = jax.nn.sigmoid(h @ wu + bu)
    a = (a_v * a_u) @ wa + ba                      # (B, N, 1)
    a = jnp.swapaxes(a, 1, 2)                      # (B, 1, N)
    a = jax.nn.softmax(a, axis=2)
    m = jnp.matmul(a, h)[:, 0, :]                  # (B, L)
    m = jnp.tanh(m @ w2 + b2[0])
    m = jnp.tanh(m @ w3 + b3[0])
    y_prob = jax.nn.sigmoid(m @ wc + bc[0])
    c = jnp.tanh(m @ wd1 + bd1[0])
    pc = jax.nn.softmax(c @ wd2 + bd2[0], axis=1)
    y_hat = (y_prob >= 0.5).astype(jnp.float32)
    return y_prob, y_hat, a, pc


if __name__ == "__main__":
    key = jax.random.PRNGKey(0)
    key, kx = jax.random.split(key)

    B, N = 2, 8                                    # small: 2 bags x 8 instances
    x = jax.random.normal(kx, (B, N, NB_FEATURES), jnp.float32)
    constant = 1.0
    params = _init_params(key)

    outs = gated_attention_forward(x, params, constant)
    outs = jax.block_until_ready(outs)
    Y_prob, Y_hat, A, prob_center = outs

    # sanity check against pure-JAX f32 reference (bf16 matmul path -> loose tol)
    rY_prob, rY_hat, rA, rpc = _ref_forward(x, params)
    assert Y_prob.shape == rY_prob.shape, (Y_prob.shape, rY_prob.shape)
    assert Y_hat.shape == rY_hat.shape, (Y_hat.shape, rY_hat.shape)
    assert A.shape == rA.shape, (A.shape, rA.shape)
    assert prob_center.shape == rpc.shape, (prob_center.shape, rpc.shape)

    tol = dict(rtol=3e-2, atol=3e-2)
    assert jnp.allclose(Y_prob, rY_prob, **tol), float(jnp.max(jnp.abs(Y_prob - rY_prob)))
    assert jnp.allclose(A, rA, **tol), float(jnp.max(jnp.abs(A - rA)))
    assert jnp.allclose(prob_center, rpc, **tol), float(jnp.max(jnp.abs(prob_center - rpc)))
    # Y_hat must be exactly the threshold of the kernel's own Y_prob
    assert jnp.array_equal(Y_hat, (Y_prob >= 0.5).astype(jnp.float32))

    print("KERNEL_OK")
</pallas_src>

<mosaic_0001>
module attributes {stable_mosaic.version = 11 : i64} {
  func.func @kernel(%arg0: i32, %arg1: memref<2x8x2048xf32, #tpu.memory_space<vmem>>, %arg2: memref<2048x256xbf16, #tpu.memory_space<vmem>>, %arg3: memref<256x512xbf16, #tpu.memory_space<vmem>>, %arg4: memref<256x128xbf16, #tpu.memory_space<vmem>>, %arg5: memref<128x64xbf16, #tpu.memory_space<vmem>>, %arg6: memref<64x32xbf16, #tpu.memory_space<vmem>>, %arg7: memref<32x5xbf16, #tpu.memory_space<vmem>>, %arg8: memref<1x1920xf32, #tpu.memory_space<vmem>>, %arg9: memref<2x8xf32, #tpu.memory_space<vmem>>, %arg10: memref<2x8xf32, #tpu.memory_space<vmem>>) attributes {dimension_semantics = [#tpu.dimension_semantics<parallel>], iteration_bounds = array<i64: 1>, scalar_prefetch = 0 : i64, scratch_operands = 0 : i64, tpu.core_type = #tpu.core_type<tc>, window_params = [{transform_indices = @transform_0, window_bounds = array<i64: 2, 8, 2048>}, {pipeline_mode = #tpu.pipeline_mode<synchronous>, transform_indices = @transform_1, window_bounds = array<i64: 2048, 256>}, {pipeline_mode = #tpu.pipeline_mode<synchronous>, transform_indices = @transform_2, window_bounds = array<i64: 256, 512>}, {pipeline_mode = #tpu.pipeline_mode<synchronous>, transform_indices = @transform_3, window_bounds = array<i64: 256, 128>}, {pipeline_mode = #tpu.pipeline_mode<synchronous>, transform_indices = @transform_4, window_bounds = array<i64: 128, 64>}, {pipeline_mode = #tpu.pipeline_mode<synchronous>, transform_indices = @transform_5, window_bounds = array<i64: 64, 32>}, {pipeline_mode = #tpu.pipeline_mode<synchronous>, transform_indices = @transform_6, window_bounds = array<i64: 32, 5>}, {pipeline_mode = #tpu.pipeline_mode<synchronous>, transform_indices = @transform_7, window_bounds = array<i64: 1, 1920>}, {transform_indices = @transform_8, window_bounds = array<i64: 2, 8>}, {transform_indices = @transform_9, window_bounds = array<i64: 2, 8>}]} {
    %c0 = arith.constant 0 : index
    %c0_0 = arith.constant 0 : index
    %c0_1 = arith.constant 0 : index
    %0 = vector.load %arg1[%c0, %c0_0, %c0_1] : memref<2x8x2048xf32, #tpu.memory_space<vmem>>, vector<2x8x2048xf32>
    %1 = vector.shape_cast %0 : vector<2x8x2048xf32> to vector<16x2048xf32>
    %2 = arith.truncf %1 : vector<16x2048xf32> to vector<16x2048xbf16>
    %c0_2 = arith.constant 0 : index
    %c0_3 = arith.constant 0 : index
    %3 = vector.load %arg2[%c0_2, %c0_3] : memref<2048x256xbf16, #tpu.memory_space<vmem>>, vector<2048x256xbf16>
    %cst = arith.constant dense<0.000000e+00> : vector<16x256xf32>
    %4 = tpu.matmul %2, %3, %cst {dimension_numbers = #tpu.dot_dimension_numbers<[1], [0], [0], [1], [0, 0, 1, 1], [], []>} : vector<16x2048xbf16>, vector<2048x256xbf16>, vector<16x256xf32> -> vector<16x256xf32>
    %c0_4 = arith.constant 0 : index
    %c0_5 = arith.constant 0 : index
    %5 = vector.load %arg8[%c0_4, %c0_5] : memref<1x1920xf32, #tpu.memory_space<vmem>>, vector<1x256xf32>
    %6 = vector.broadcast %5 : vector<1x256xf32> to vector<16x256xf32>
    %7 = arith.addf %4, %6 : vector<16x256xf32>
    %8 = arith.truncf %7 : vector<16x256xf32> to vector<16x256xbf16>
    %c0_6 = arith.constant 0 : index
    %c0_7 = arith.constant 0 : index
    %9 = vector.load %arg3[%c0_6, %c0_7] : memref<256x512xbf16, #tpu.memory_space<vmem>>, vector<256x512xbf16>
    %cst_8 = arith.constant dense<0.000000e+00> : vector<16x512xf32>
    %10 = tpu.matmul %8, %9, %cst_8 {dimension_numbers = #tpu.dot_dimension_numbers<[1], [0], [0], [1], [0, 0, 1, 1], [], []>} : vector<16x256xbf16>, vector<256x512xbf16>, vector<16x512xf32> -> vector<16x512xf32>
    %c0_9 = arith.constant 0 : index
    %c256 = arith.constant 256 : index
    %11 = vector.load %arg8[%c0_9, %c256] : memref<1x1920xf32, #tpu.memory_space<vmem>>, vector<1x512xf32>
    %12 = vector.broadcast %11 : vector<1x512xf32> to vector<16x512xf32>
    %13 = arith.addf %10, %12 : vector<16x512xf32>
    %14 = vector.extract_strided_slice %13 {offsets = [0, 0], sizes = [16, 256], strides = [1, 1]} : vector<16x512xf32> to vector<16x256xf32>
    %15 = math.tanh %14 : vector<16x256xf32>
    %16 = vector.extract_strided_slice %13 {offsets = [0, 256], sizes = [16, 256], strides = [1, 1]} : vector<16x512xf32> to vector<16x256xf32>
    %17 = arith.negf %16 : vector<16x256xf32>
    %18 = math.exp %17 : vector<16x256xf32>
    %cst_10 = arith.constant 1.000000e+00 : f32
    %19 = vector.broadcast %cst_10 : f32 to vector<16x256xf32>
    %20 = arith.addf %19, %18 : vector<16x256xf32>
    %21 = arith.divf %19, %20 : vector<16x256xf32>
    %22 = arith.mulf %15, %21 : vector<16x256xf32>
    %23 = vector.shape_cast %22 : vector<16x256xf32> to vector<2x8x256xf32>
    %c0_11 = arith.constant 0 : index
    %c768 = arith.constant 768 : index
    %24 = vector.load %arg8[%c0_11, %c768] : memref<1x1920xf32, #tpu.memory_space<vmem>>, vector<1x256xf32>
    %25 = vector.shape_cast %24 : vector<1x256xf32> to vector<1x1x256xf32>
    %26 = vector.broadcast %25 : vector<1x1x256xf32> to vector<2x8x256xf32>
    %27 = arith.mulf %23, %26 : vector<2x8x256xf32>
    %cst_12 = arith.constant dense<0.000000e+00> : vector<2x8xf32>
    %28 = vector.multi_reduction <add>, %27, %cst_12 [2] : vector<2x8x256xf32> to vector<2x8xf32>
    %c0_13 = arith.constant 0 : index
    %c1024 = arith.constant 1024 : index
    %29 = vector.load %arg8[%c0_13, %c1024] : memref<1x1920xf32, #tpu.memory_space<vmem>>, vector<1x1xf32>
    %30 = vector.broadcast %29 : vector<1x1xf32> to vector<2x8xf32>
    %31 = arith.addf %28, %30 : vector<2x8xf32>
    %cst_14 = arith.constant dense<0xFF800000> : vector<2xf32>
    %32 = vector.multi_reduction <maximumf>, %31, %cst_14 [1] : vector<2x8xf32> to vector<2xf32>
    %33 = vector.shape_cast %32 : vector<2xf32> to vector<2x1xf32>
    %34 = vector.broadcast %33 : vector<2x1xf32> to vector<2x8xf32>
    %35 = arith.subf %31, %34 : vector<2x8xf32>
    %36 = math.exp %35 : vector<2x8xf32>
    %cst_15 = arith.constant dense<0.000000e+00> : vector<2xf32>
    %37 = vector.multi_reduction <add>, %36, %cst_15 [1] : vector<2x8xf32> to vector<2xf32>
    %38 = vector.shape_cast %37 : vector<2xf32> to vector<2x1xf32>
    %39 = vector.broadcast %38 : vector<2x1xf32> to vector<2x8xf32>
    %40 = arith.divf %36, %39 : vector<2x8xf32>
    %41 = vector.shape_cast %7 : vector<16x256xf32> to vector<2x8x256xf32>
    %42 = vector.shape_cast %40 : vector<2x8xf32> to vector<2x8x1xf32>
    %43 = vector.broadcast %42 : vector<2x8x1xf32> to vector<2x8x256xf32>
    %44 = arith.mulf %43, %41 : vector<2x8x256xf32>
    %cst_16 = arith.constant dense<0.000000e+00> : vector<2x256xf32>
    %45 = vector.multi_reduction <add>, %44, %cst_16 [1] : vector<2x8x256xf32> to vector<2x256xf32>
    %46 = arith.truncf %45 : vector<2x256xf32> to vector<2x256xbf16>
    %c0_17 = arith.constant 0 : index
    %c0_18 = arith.constant 0 : index
    %47 = vector.load %arg4[%c0_17, %c0_18] : memref<256x128xbf16, #tpu.memory_space<vmem>>, vector<256x128xbf16>
    %cst_19 = arith.constant dense<0.000000e+00> : vector<2x128xf32>
    %48 = tpu.matmul %46, %47, %cst_19 {dimension_numbers = #tpu.dot_dimension_numbers<[1], [0], [0], [1], [0, 0, 1, 1], [], []>} : vector<2x256xbf16>, vector<256x128xbf16>, vector<2x128xf32> -> vector<2x128xf32>
    %c0_20 = arith.constant 0 : index
    %c1152 = arith.constant 1152 : index
    %49 = vector.load %arg8[%c0_20, %c1152] : memref<1x1920xf32, #tpu.memory_space<vmem>>, vector<1x128xf32>
    %50 = vector.broadcast %49 : vector<1x128xf32> to vector<2x128xf32>
    %51 = arith.addf %48, %50 : vector<2x128xf32>
    %52 = math.tanh %51 : vector<2x128xf32>
    %53 = arith.truncf %52 : vector<2x128xf32> to vector<2x128xbf16>
    %c0_21 = arith.constant 0 : index
    %c0_22 = arith.constant 0 : index
    %54 = vector.load %arg5[%c0_21, %c0_22] : memref<128x64xbf16, #tpu.memory_space<vmem>>, vector<128x64xbf16>
    %cst_23 = arith.constant dense<0.000000e+00> : vector<2x64xf32>
    %55 = tpu.matmul %53, %54, %cst_23 {dimension_numbers = #tpu.dot_dimension_numbers<[1], [0], [0], [1], [0, 0, 1, 1], [], []>} : vector<2x128xbf16>, vector<128x64xbf16>, vector<2x64xf32> -> vector<2x64xf32>
    %c0_24 = arith.constant 0 : index
    %c1280 = arith.constant 1280 : index
    %56 = vector.load %arg8[%c0_24, %c1280] : memref<1x1920xf32, #tpu.memory_space<vmem>>, vector<1x64xf32>
    %57 = vector.broadcast %56 : vector<1x64xf32> to vector<2x64xf32>
    %58 = arith.addf %55, %57 : vector<2x64xf32>
    %59 = math.tanh %58 : vector<2x64xf32>
    %c0_25 = arith.constant 0 : index
    %c1408 = arith.constant 1408 : index
    %60 = vector.load %arg8[%c0_25, %c1408] : memref<1x1920xf32, #tpu.memory_space<vmem>>, vector<1x64xf32>
    %61 = vector.broadcast %60 : vector<1x64xf32> to vector<2x64xf32>
    %62 = arith.mulf %59, %61 : vector<2x64xf32>
    %cst_26 = arith.constant dense<0.000000e+00> : vector<2xf32>
    %63 = vector.multi_reduction <add>, %62, %cst_26 [1] : vector<2x64xf32> to vector<2xf32>
    %64 = vector.shape_cast %63 : vector<2xf32> to vector<2x1xf32>
    %c0_27 = arith.constant 0 : index
    %c1536 = arith.constant 1536 : index
    %65 = vector.load %arg8[%c0_27, %c1536] : memref<1x1920xf32, #tpu.memory_space<vmem>>, vector<1x1xf32>
    %66 = vector.broadcast %65 : vector<1x1xf32> to vector<2x1xf32>
    %67 = arith.addf %64, %66 : vector<2x1xf32>
    %68 = arith.negf %67 : vector<2x1xf32>
    %69 = math.exp %68 : vector<2x1xf32>
    %cst_28 = arith.constant 1.000000e+00 : f32
    %70 = vector.broadcast %cst_28 : f32 to vector<2x1xf32>
    %71 = arith.addf %70, %69 : vector<2x1xf32>
    %72 = arith.divf %70, %71 : vector<2x1xf32>
    %cst_29 = arith.constant 5.000000e-01 : f32
    %73 = vector.broadcast %cst_29 : f32 to vector<2x1xf32>
    %74 = arith.cmpf oge, %72, %73 : vector<2x1xf32>
    %75 = arith.extui %74 : vector<2x1xi1> to vector<2x1xi32>
    %76 = arith.sitofp %75 : vector<2x1xi32> to vector<2x1xf32>
    %77 = arith.truncf %59 : vector<2x64xf32> to vector<2x64xbf16>
    %c0_30 = arith.constant 0 : index
    %c0_31 = arith.constant 0 : index
    %78 = vector.load %arg6[%c0_30, %c0_31] : memref<64x32xbf16, #tpu.memory_space<vmem>>, vector<64x32xbf16>
    %cst_32 = arith.constant dense<0.000000e+00> : vector<2x32xf32>
    %79 = tpu.matmul %77, %78, %cst_32 {dimension_numbers = #tpu.dot_dimension_numbers<[1], [0], [0], [1], [0, 0, 1, 1], [], []>} : vector<2x64xbf16>, vector<64x32xbf16>, vector<2x32xf32> -> vector<2x32xf32>
    %c0_33 = arith.constant 0 : index
    %c1664 = arith.constant 1664 : index
    %80 = vector.load %arg8[%c0_33, %c1664] : memref<1x1920xf32, #tpu.memory_space<vmem>>, vector<1x32xf32>
    %81 = vector.broadcast %80 : vector<1x32xf32> to vector<2x32xf32>
    %82 = arith.addf %79, %81 : vector<2x32xf32>
    %83 = math.tanh %82 : vector<2x32xf32>
    %84 = arith.truncf %83 : vector<2x32xf32> to vector<2x32xbf16>
    %c0_34 = arith.constant 0 : index
    %c0_35 = arith.constant 0 : index
    %85 = vector.load %arg7[%c0_34, %c0_35] : memref<32x5xbf16, #tpu.memory_space<vmem>>, vector<32x5xbf16>
    %cst_36 = arith.constant dense<0.000000e+00> : vector<2x5xf32>
    %86 = tpu.matmul %84, %85, %cst_36 {dimension_numbers = #tpu.dot_dimension_numbers<[1], [0], [0], [1], [0, 0, 1, 1], [], []>} : vector<2x32xbf16>, vector<32x5xbf16>, vector<2x5xf32> -> vector<2x5xf32>
    %c0_37 = arith.constant 0 : index
    %c1792 = arith.constant 1792 : index
    %87 = vector.load %arg8[%c0_37, %c1792] : memref<1x1920xf32, #tpu.memory_space<vmem>>, vector<1x5xf32>
    %88 = vector.broadcast %87 : vector<1x5xf32> to vector<2x5xf32>
    %89 = arith.addf %86, %88 : vector<2x5xf32>
    %cst_38 = arith.constant dense<0xFF800000> : vector<2xf32>
    %90 = vector.multi_reduction <maximumf>, %89, %cst_38 [1] : vector<2x5xf32> to vector<2xf32>
    %91 = vector.shape_cast %90 : vector<2xf32> to vector<2x1xf32>
    %92 = vector.broadcast %91 : vector<2x1xf32> to vector<2x5xf32>
    %93 = arith.subf %89, %92 : vector<2x5xf32>
    %94 = math.exp %93 : vector<2x5xf32>
    %cst_39 = arith.constant dense<0.000000e+00> : vector<2xf32>
    %95 = vector.multi_reduction <add>, %94, %cst_39 [1] : vector<2x5xf32> to vector<2xf32>
    %96 = vector.shape_cast %95 : vector<2xf32> to vector<2x1xf32>
    %97 = vector.broadcast %96 : vector<2x1xf32> to vector<2x5xf32>
    %98 = arith.divf %94, %97 : vector<2x5xf32>
    %c0_40 = arith.constant 0 : index
    %c0_41 = arith.constant 0 : index
    %99 = vector.load %arg9[%c0_40, %c0_41] : memref<2x8xf32, #tpu.memory_space<vmem>>, vector<2x8xf32>
    tpu.vector_store %arg9[%c0_40, %c0_41], %40 {strides = array<i32>} : memref<2x8xf32, #tpu.memory_space<vmem>>, vector<2x8xf32>,
    %cst_42 = arith.constant 0.000000e+00 : f32
    %100 = vector.broadcast %cst_42 : f32 to vector<2x1xf32>
    %101 = tpu.concatenate %72, %76, %98, %100 in 1 : vector<2x1xf32>, vector<2x1xf32>, vector<2x5xf32>, vector<2x1xf32> -> vector<2x8xf32>
    %c0_43 = arith.constant 0 : index
    %c0_44 = arith.constant 0 : index
    %102 = vector.load %arg10[%c0_43, %c0_44] : memref<2x8xf32, #tpu.memory_space<vmem>>, vector<2x8xf32>
    tpu.vector_store %arg10[%c0_43, %c0_44], %101 {strides = array<i32>} : memref<2x8xf32, #tpu.memory_space<vmem>>, vector<2x8xf32>,
    return
  }
  func.func @transform_0(%arg0: i32) -> (i32, i32, i32) {
    %c0_i32 = arith.constant 0 : i32
    %c0_i32_0 = arith.constant 0 : i32
    %c0_i32_1 = arith.constant 0 : i32
    return %arg0, %c0_i32, %c0_i32_0 : i32, i32, i32
  }
  func.func @transform_1(%arg0: i32) -> (i32, i32) {
    %c0_i32 = arith.constant 0 : i32
    %c0_i32_0 = arith.constant 0 : i32
    %c0_i32_1 = arith.constant 0 : i32
    return %c0_i32, %c0_i32_0 : i32, i32
  }
  func.func @transform_2(%arg0: i32) -> (i32, i32) {
    %c0_i32 = arith.constant 0 : i32
    %c0_i32_0 = arith.constant 0 : i32
    %c0_i32_1 = arith.constant 0 : i32
    return %c0_i32, %c0_i32_0 : i32, i32
  }
  func.func @transform_3(%arg0: i32) -> (i32, i32) {
    %c0_i32 = arith.constant 0 : i32
    %c0_i32_0 = arith.constant 0 : i32
    %c0_i32_1 = arith.constant 0 : i32
    return %c0_i32, %c0_i32_0 : i32, i32
  }
  func.func @transform_4(%arg0: i32) -> (i32, i32) {
    %c0_i32 = arith.constant 0 : i32
    %c0_i32_0 = arith.constant 0 : i32
    %c0_i32_1 = arith.constant 0 : i32
    return %c0_i32, %c0_i32_0 : i32, i32
  }
  func.func @transform_5(%arg0: i32) -> (i32, i32) {
    %c0_i32 = arith.constant 0 : i32
    %c0_i32_0 = arith.constant 0 : i32
    %c0_i32_1 = arith.constant 0 : i32
    return %c0_i32, %c0_i32_0 : i32, i32
  }
  func.func @transform_6(%arg0: i32) -> (i32, i32) {
    %c0_i32 = arith.constant 0 : i32
    %c0_i32_0 = arith.constant 0 : i32
    %c0_i32_1 = arith.constant 0 : i32
    return %c0_i32, %c0_i32_0 : i32, i32
  }
  func.func @transform_7(%arg0: i32) -> (i32, i32) {
    %c0_i32 = arith.constant 0 : i32
    %c0_i32_0 = arith.constant 0 : i32
    %c0_i32_1 = arith.constant 0 : i32
    return %c0_i32, %c0_i32_0 : i32, i32
  }
  func.func @transform_8(%arg0: i32) -> (i32, i32) {
    %c0_i32 = arith.constant 0 : i32
    %c0_i32_0 = arith.constant 0 : i32
    return %arg0, %c0_i32 : i32, i32
  }
  func.func @transform_9(%arg0: i32) -> (i32, i32) {
    %c0_i32 = arith.constant 0 : i32
    %c0_i32_0 = arith.constant 0 : i32
    return %arg0, %c0_i32 : i32, i32
  }
}

</mosaic_0001>

<llo_original>
// kernel: gated_attention_forward.1
$region0: #{gated_attention_forward.1}
  #allocation0 [shape = 'u32[]', space=smem, size = 0x4, offset = 0x4, fixed_abs, tag = 'smem constant byte address 0x4 - core index']
  #allocation1 [shape = 'u32[144,128]{1,0:T(1,128)}', space=vmem, size = 0x12000, scoped, tag = 'internal scratch']
  %s0 = inlined_call_operand.vmem [shape: f32[2,8,2048], index: 0, kind: input, shape index: {}]
  %s1 = inlined_call_operand.vmem [shape: bf16[2048,256], index: 1, kind: input, shape index: {}]
  %s2 = inlined_call_operand.vmem [shape: bf16[256,512], index: 2, kind: input, shape index: {}]
  %s3 = inlined_call_operand.vmem [shape: bf16[256,128], index: 3, kind: input, shape index: {}]
  %s4 = inlined_call_operand.vmem [shape: bf16[128,64], index: 4, kind: input, shape index: {}]
  %s5 = inlined_call_operand.vmem [shape: bf16[64,32], index: 5, kind: input, shape index: {}]
  %s6 = inlined_call_operand.vmem [shape: bf16[32,5], index: 6, kind: input, shape index: {}]
  %s7 = inlined_call_operand.vmem [shape: f32[1,1920], index: 7, kind: input, shape index: {}]
  %s8 = inlined_call_operand.hbm [shape: f32[2,8], index: 8, kind: output, shape index: {0}]
  %s9 = inlined_call_operand.vmem [shape: f32[2,8], index: 9, kind: output, shape index: {1}]
  %10 = xla_tuple %s8, %s9
  %s11 = sld [smem:[#allocation0]]
  $region50: #{gated_attention_forward.1} parent=0
    _
  %s13 = ssub.s32 1, %s11
  %s14 = scalar_select 0, %s13, %s11
  $region1: #{gated_attention_forward.1} parent=0
    #allocation2 [shape = 'u8[1024]{0}', space=vmem, size = 0x400, scoped, tag = 'output window, operand 0, single buffered']
    #allocation3 [shape = 's32[1]{0}', space=sflag, size = 0x4, scoped, tag = 'scoped memory for gated_attention_forward.1']
    %15 = vsyncpa [#allocation3], 0
    // Predicated region
    $region2: #{gated_attention_forward.1} parent=1 // pred_check
      _
    $region3: #{gated_attention_forward.1} parent=1 // pred_check_branch
      %17 = sbr.rel (0) target = $region5
    $region4: #{gated_attention_forward.1} parent=1 // pred_region
      _
    $region5: #{gated_attention_forward.1} parent=1 // pred_fallthru
      _
    // Predicated region
    $region6: #{gated_attention_forward.1} parent=1 // pred_check
      _
    $region7: #{gated_attention_forward.1} parent=1 // pred_check_branch
      %19 = sbr.rel (0) target = $region9
    $region8: #{gated_attention_forward.1} parent=1 // pred_region
      _
    $region9: #{gated_attention_forward.1} parent=1 // pred_fallthru
      _
    // Predicated region
    $region10: #{gated_attention_forward.1} parent=1 // pred_check
      _
    $region11: #{gated_attention_forward.1} parent=1 // pred_check_branch
      %21 = sbr.rel (0) target = $region13
    $region12: #{gated_attention_forward.1} parent=1 // pred_region
      _
    $region13: #{gated_attention_forward.1} parent=1 // pred_fallthru
      _
    // Predicated region
    $region14: #{gated_attention_forward.1} parent=1 // pred_check
      _
    $region15: #{gated_attention_forward.1} parent=1 // pred_check_branch
      %23 = sbr.rel (0) target = $region17
    $region16: #{gated_attention_forward.1} parent=1 // pred_region
      _
    $region17: #{gated_attention_forward.1} parent=1 // pred_fallthru
      _
    // Predicated region
    $region18: #{gated_attention_forward.1} parent=1 // pred_check
      _
    $region19: #{gated_attention_forward.1} parent=1 // pred_check_branch
      %25 = sbr.rel (0) target = $region21
    $region20: #{gated_attention_forward.1} parent=1 // pred_region
      _
    $region21: #{gated_attention_forward.1} parent=1 // pred_fallthru
      _
    // Predicated region
    $region22: #{gated_attention_forward.1} parent=1 // pred_check
      _
    $region23: #{gated_attention_forward.1} parent=1 // pred_check_branch
      %27 = sbr.rel (0) target = $region25
    $region24: #{gated_attention_forward.1} parent=1 // pred_region
      _
    $region25: #{gated_attention_forward.1} parent=1 // pred_fallthru
      _
    // Predicated region
    $region26: #{gated_attention_forward.1} parent=1 // pred_check
      _
    $region27: #{gated_attention_forward.1} parent=1 // pred_check_branch
      %29 = sbr.rel (0) target = $region29
    $region28: #{gated_attention_forward.1} parent=1 // pred_region
      _
    $region29: #{gated_attention_forward.1} parent=1 // pred_fallthru
      _
    // Predicated region
    $region30: #{gated_attention_forward.1} parent=1 // pred_check
      _
    $region31: #{gated_attention_forward.1} parent=1 // pred_check_branch
      %31 = sbr.rel (0) target = $region33
    $region32: #{gated_attention_forward.1} parent=1 // pred_region
      _
    $region33: #{gated_attention_forward.1} parent=1 // pred_fallthru
      _
    %v33 = vld [vmem:[%s0] sm:$0xff]
    %v34 = vld [vmem:[%s0 + $0x8] sm:$0xff]
    %v35 = vld [vmem:[%s0 + $0x10] sm:$0xff]
    %v36 = vld [vmem:[%s0 + $0x18] sm:$0xff]
    %v37 = vld [vmem:[%s0 + $0x20] sm:$0xff]
    %v38 = vld [vmem:[%s0 + $0x28] sm:$0xff]
    %v39 = vld [vmem:[%s0 + $0x30] sm:$0xff]
    %v40 = vld [vmem:[%s0 + $0x38] sm:$0xff]
    %v41 = vld [vmem:[%s0 + $0x40] sm:$0xff]
    %v42 = vld [vmem:[%s0 + $0x48] sm:$0xff]
    %v43 = vld [vmem:[%s0 + $0x50] sm:$0xff]
    %v44 = vld [vmem:[%s0 + $0x58] sm:$0xff]
    %v45 = vld [vmem:[%s0 + $0x60] sm:$0xff]
    %v46 = vld [vmem:[%s0 + $0x68] sm:$0xff]
    %v47 = vld [vmem:[%s0 + $0x70] sm:$0xff]
    %v48 = vld [vmem:[%s0 + $0x78] sm:$0xff]
    %v49 = vld [vmem:[%s0 + $0x80] sm:$0xff]
    %v50 = vld [vmem:[%s0 + $0x88] sm:$0xff]
    %v51 = vld [vmem:[%s0 + $0x90] sm:$0xff]
    %v52 = vld [vmem:[%s0 + $0x98] sm:$0xff]
    %v53 = vld [vmem:[%s0 + $0xa0] sm:$0xff]
    %v54 = vld [vmem:[%s0 + $0xa8] sm:$0xff]
    %v55 = vld [vmem:[%s0 + $0xb0] sm:$0xff]
    %v56 = vld [vmem:[%s0 + $0xb8] sm:$0xff]
    %v57 = vld [vmem:[%s0 + $0xc0] sm:$0xff]
    %v58 = vld [vmem:[%s0 + $0xc8] sm:$0xff]
    %v59 = vld [vmem:[%s0 + $0xd0] sm:$0xff]
    %v60 = vld [vmem:[%s0 + $0xd8] sm:$0xff]
    %v61 = vld [vmem:[%s0 + $0xe0] sm:$0xff]
    %v62 = vld [vmem:[%s0 + $0xe8] sm:$0xff]
    %v63 = vld [vmem:[%s0 + $0xf0] sm:$0xff]
    %v64 = vld [vmem:[%s0 + $0xf8] sm:$0xff]
    %v65 = vpack.c.bf16 %v49, %v33
    %v66 = vpack.c.bf16 %v50, %v34
    %v67 = vpack.c.bf16 %v51, %v35
    %v68 = vpack.c.bf16 %v52, %v36
    %v69 = vpack.c.bf16 %v53, %v37
    %v70 = vpack.c.bf16 %v54, %v38
    %v71 = vpack.c.bf16 %v55, %v39
    %v72 = vpack.c.bf16 %v56, %v40
    %v73 = vpack.c.bf16 %v57, %v41
    %v74 = vpack.c.bf16 %v58, %v42
    %v75 = vpack.c.bf16 %v59, %v43
    %v76 = vpack.c.bf16 %v60, %v44
    %v77 = vpack.c.bf16 %v61, %v45
    %v78 = vpack.c.bf16 %v62, %v46
    %v79 = vpack.c.bf16 %v63, %v47
    %v80 = vpack.c.bf16 %v64, %v48
    %v81 = vld [vmem:[%s1] sm:$0xff]
    %v82 = vld [vmem:[%s1 + $0x8] sm:$0xff]
    %v83 = vld [vmem:[%s1 + $0x10] sm:$0xff]
    %v84 = vld [vmem:[%s1 + $0x18] sm:$0xff]
    %v85 = vld [vmem:[%s1 + $0x20] sm:$0xff]
    %v86 = vld [vmem:[%s1 + $0x28] sm:$0xff]
    %v87 = vld [vmem:[%s1 + $0x30] sm:$0xff]
    %v88 = vld [vmem:[%s1 + $0x38] sm:$0xff]
    %v89 = vld [vmem:[%s1 + $0x40] sm:$0xff]
    %v90 = vld [vmem:[%s1 + $0x48] sm:$0xff]
    %v91 = vld [vmem:[%s1 + $0x50] sm:$0xff]
    %v92 = vld [vmem:[%s1 + $0x58] sm:$0xff]
    %v93 = vld [vmem:[%s1 + $0x60] sm:$0xff]
    %v94 = vld [vmem:[%s1 + $0x68] sm:$0xff]
    %v95 = vld [vmem:[%s1 + $0x70] sm:$0xff]
    %v96 = vld [vmem:[%s1 + $0x78] sm:$0xff]
    %v97 = vld [vmem:[%s1 + $0x80] sm:$0xff]
    %v98 = vld [vmem:[%s1 + $0x88] sm:$0xff]
    %v99 = vld [vmem:[%s1 + $0x90] sm:$0xff]
    %v100 = vld [vmem:[%s1 + $0x98] sm:$0xff]
    %v101 = vld [vmem:[%s1 + $0xa0] sm:$0xff]
    %v102 = vld [vmem:[%s1 + $0xa8] sm:$0xff]
    %v103 = vld [vmem:[%s1 + $0xb0] sm:$0xff]
    %v104 = vld [vmem:[%s1 + $0xb8] sm:$0xff]
    %v105 = vld [vmem:[%s1 + $0xc0] sm:$0xff]
    %v106 = vld [vmem:[%s1 + $0xc8] sm:$0xff]
    %v107 = vld [vmem:[%s1 + $0xd0] sm:$0xff]
    %v108 = vld [vmem:[%s1 + $0xd8] sm:$0xff]
    %v109 = vld [vmem:[%s1 + $0xe0] sm:$0xff]
    %v110 = vld [vmem:[%s1 + $0xe8] sm:$0xff]
    %v111 = vld [vmem:[%s1 + $0xf0] sm:$0xff]
    %v112 = vld [vmem:[%s1 + $0xf8] sm:$0xff]
    %v113 = vld [vmem:[%s1 + $0x100] sm:$0xff]
    %v114 = vld [vmem:[%s1 + $0x108] sm:$0xff]
    %v115 = vld [vmem:[%s1 + $0x110] sm:$0xff]
    %v116 = vld [vmem:[%s1 + $0x118] sm:$0xff]
    %v117 = vld [vmem:[%s1 + $0x120] sm:$0xff]
    %v118 = vld [vmem:[%s1 + $0x128] sm:$0xff]
    %v119 = vld [vmem:[%s1 + $0x130] sm:$0xff]
    %v120 = vld [vmem:[%s1 + $0x138] sm:$0xff]
    %v121 = vld [vmem:[%s1 + $0x140] sm:$0xff]
    %v122 = vld [vmem:[%s1 + $0x148] sm:$0xff]
    %v123 = vld [vmem:[%s1 + $0x150] sm:$0xff]
    %v124 = vld [vmem:[%s1 + $0x158] sm:$0xff]
    %v125 = vld [vmem:[%s1 + $0x160] sm:$0xff]
    %v126 = vld [vmem:[%s1 + $0x168] sm:$0xff]
    %v127 = vld [vmem:[%s1 + $0x170] sm:$0xff]
    %v128 = vld [vmem:[%s1 + $0x178] sm:$0xff]
    %v129 = vld [vmem:[%s1 + $0x180] sm:$0xff]
    %v130 = vld [vmem:[%s1 + $0x188] sm:$0xff]
    %v131 = vld [vmem:[%s1 + $0x190] sm:$0xff]
    %v132 = vld [vmem:[%s1 + $0x198] sm:$0xff]
    %v133 = vld [vmem:[%s1 + $0x1a0] sm:$0xff]
    %v134 = vld [vmem:[%s1 + $0x1a8] sm:$0xff]
    %v135 = vld [vmem:[%s1 + $0x1b0] sm:$0xff]
    %v136 = vld [vmem:[%s1 + $0x1b8] sm:$0xff]
    %v137 = vld [vmem:[%s1 + $0x1c0] sm:$0xff]
    %v138 = vld [vmem:[%s1 + $0x1c8] sm:$0xff]
    %v139 = vld [vmem:[%s1 + $0x1d0] sm:$0xff]
    %v140 = vld [vmem:[%s1 + $0x1d8] sm:$0xff]
    %v141 = vld [vmem:[%s1 + $0x1e0] sm:$0xff]
    %v142 = vld [vmem:[%s1 + $0x1e8] sm:$0xff]
    %v143 = vld [vmem:[%s1 + $0x1f0] sm:$0xff]
    %v144 = vld [vmem:[%s1 + $0x1f8] sm:$0xff]
    %v145 = vld [vmem:[%s1 + $0x200] sm:$0xff]
    %v146 = vld [vmem:[%s1 + $0x208] sm:$0xff]
    %v147 = vld [vmem:[%s1 + $0x210] sm:$0xff]
    %v148 = vld [vmem:[%s1 + $0x218] sm:$0xff]
    %v149 = vld [vmem:[%s1 + $0x220] sm:$0xff]
    %v150 = vld [vmem:[%s1 + $0x228] sm:$0xff]
    %v151 = vld [vmem:[%s1 + $0x230] sm:$0xff]
    %v152 = vld [vmem:[%s1 + $0x238] sm:$0xff]
    %v153 = vld [vmem:[%s1 + $0x240] sm:$0xff]
    %v154 = vld [vmem:[%s1 + $0x248] sm:$0xff]
    %v155 = vld [vmem:[%s1 + $0x250] sm:$0xff]
    %v156 = vld [vmem:[%s1 + $0x258] sm:$0xff]
    %v157 = vld [vmem:[%s1 + $0x260] sm:$0xff]
    %v158 = vld [vmem:[%s1 + $0x268] sm:$0xff]
    %v159 = vld [vmem:[%s1 + $0x270] sm:$0xff]
    %v160 = vld [vmem:[%s1 + $0x278] sm:$0xff]
    %v161 = vld [vmem:[%s1 + $0x280] sm:$0xff]
    %v162 = vld [vmem:[%s1 + $0x288] sm:$0xff]
    %v163 = vld [vmem:[%s1 + $0x290] sm:$0xff]
    %v164 = vld [vmem:[%s1 + $0x298] sm:$0xff]
    %v165 = vld [vmem:[%s1 + $0x2a0] sm:$0xff]
    %v166 = vld [vmem:[%s1 + $0x2a8] sm:$0xff]
    %v167 = vld [vmem:[%s1 + $0x2b0] sm:$0xff]
    %v168 = vld [vmem:[%s1 + $0x2b8] sm:$0xff]
    %v169 = vld [vmem:[%s1 + $0x2c0] sm:$0xff]
    %v170 = vld [vmem:[%s1 + $0x2c8] sm:$0xff]
    %v171 = vld [vmem:[%s1 + $0x2d0] sm:$0xff]
    %v172 = vld [vmem:[%s1 + $0x2d8] sm:$0xff]
    %v173 = vld [vmem:[%s1 + $0x2e0] sm:$0xff]
    %v174 = vld [vmem:[%s1 + $0x2e8] sm:$0xff]
    %v175 = vld [vmem:[%s1 + $0x2f0] sm:$0xff]
    %v176 = vld [vmem:[%s1 + $0x2f8] sm:$0xff]
    %v177 = vld [vmem:[%s1 + $0x300] sm:$0xff]
    %v178 = vld [vmem:[%s1 + $0x308] sm:$0xff]
    %v179 = vld [vmem:[%s1 + $0x310] sm:$0xff]
    %v180 = vld [vmem:[%s1 + $0x318] sm:$0xff]
    %v181 = vld [vmem:[%s1 + $0x320] sm:$0xff]
    %v182 = vld [vmem:[%s1 + $0x328] sm:$0xff]
    %v183 = vld [vmem:[%s1 + $0x330] sm:$0xff]
    %v184 = vld [vmem:[%s1 + $0x338] sm:$0xff]
    %v185 = vld [vmem:[%s1 + $0x340] sm:$0xff]
    %v186 = vld [vmem:[%s1 + $0x348] sm:$0xff]
    %v187 = vld [vmem:[%s1 + $0x350] sm:$0xff]
    %v188 = vld [vmem:[%s1 + $0x358] sm:$0xff]
    %v189 = vld [vmem:[%s1 + $0x360] sm:$0xff]
    %v190 = vld [vmem:[%s1 + $0x368] sm:$0xff]
    %v191 = vld [vmem:[%s1 + $0x370] sm:$0xff]
    %v192 = vld [vmem:[%s1 + $0x378] sm:$0xff]
    %v193 = vld [vmem:[%s1 + $0x380] sm:$0xff]
    %v194 = vld [vmem:[%s1 + $0x388] sm:$0xff]
    %v195 = vld [vmem:[%s1 + $0x390] sm:$0xff]
    %v196 = vld [vmem:[%s1 + $0x398] sm:$0xff]
    %v197 = vld [vmem:[%s1 + $0x3a0] sm:$0xff]
    %v198 = vld [vmem:[%s1 + $0x3a8] sm:$0xff]
    %v199 = vld [vmem:[%s1 + $0x3b0] sm:$0xff]
    %v200 = vld [vmem:[%s1 + $0x3b8] sm:$0xff]
    %v201 = vld [vmem:[%s1 + $0x3c0] sm:$0xff]
    %v202 = vld [vmem:[%s1 + $0x3c8] sm:$0xff]
    %v203 = vld [vmem:[%s1 + $0x3d0] sm:$0xff]
    %v204 = vld [vmem:[%s1 + $0x3d8] sm:$0xff]
    %v205 = vld [vmem:[%s1 + $0x3e0] sm:$0xff]
    %v206 = vld [vmem:[%s1 + $0x3e8] sm:$0xff]
    %v207 = vld [vmem:[%s1 + $0x3f0] sm:$0xff]
    %v208 = vld [vmem:[%s1 + $0x3f8] sm:$0xff]
    %v209 = vld [vmem:[%s1 + $0x400] sm:$0xff]
    %v210 = vld [vmem:[%s1 + $0x408] sm:$0xff]
    %v211 = vld [vmem:[%s1 + $0x410] sm:$0xff]
    %v212 = vld [vmem:[%s1 + $0x418] sm:$0xff]
    %v213 = vld [vmem:[%s1 + $0x420] sm:$0xff]
    %v214 = vld [vmem:[%s1 + $0x428] sm:$0xff]
    %v215 = vld [vmem:[%s1 + $0x430] sm:$0xff]
    %v216 = vld [vmem:[%s1 + $0x438] sm:$0xff]
    %v217 = vld [vmem:[%s1 + $0x440] sm:$0xff]
    %v218 = vld [vmem:[%s1 + $0x448] sm:$0xff]
    %v219 = vld [vmem:[%s1 + $0x450] sm:$0xff]
    %v220 = vld [vmem:[%s1 + $0x458] sm:$0xff]
    %v221 = vld [vmem:[%s1 + $0x460] sm:$0xff]
    %v222 = vld [vmem:[%s1 + $0x468] sm:$0xff]
    %v223 = vld [vmem:[%s1 + $0x470] sm:$0xff]
    %v224 = vld [vmem:[%s1 + $0x478] sm:$0xff]
    %v225 = vld [vmem:[%s1 + $0x480] sm:$0xff]
    %v226 = vld [vmem:[%s1 + $0x488] sm:$0xff]
    %v227 = vld [vmem:[%s1 + $0x490] sm:$0xff]
    %v228 = vld [vmem:[%s1 + $0x498] sm:$0xff]
    %v229 = vld [vmem:[%s1 + $0x4a0] sm:$0xff]
    %v230 = vld [vmem:[%s1 + $0x4a8] sm:$0xff]
    %v231 = vld [vmem:[%s1 + $0x4b0] sm:$0xff]
    %v232 = vld [vmem:[%s1 + $0x4b8] sm:$0xff]
    %v233 = vld [vmem:[%s1 + $0x4c0] sm:$0xff]
    %v234 = vld [vmem:[%s1 + $0x4c8] sm:$0xff]
    %v235 = vld [vmem:[%s1 + $0x4d0] sm:$0xff]
    %v236 = vld [vmem:[%s1 + $0x4d8] sm:$0xff]
    %v237 = vld [vmem:[%s1 + $0x4e0] sm:$0xff]
    %v238 = vld [vmem:[%s1 + $0x4e8] sm:$0xff]
    %v239 = vld [vmem:[%s1 + $0x4f0] sm:$0xff]
    %v240 = vld [vmem:[%s1 + $0x4f8] sm:$0xff]
    %v241 = vld [vmem:[%s1 + $0x500] sm:$0xff]
    %v242 = vld [vmem:[%s1 + $0x508] sm:$0xff]
    %v243 = vld [vmem:[%s1 + $0x510] sm:$0xff]
    %v244 = vld [vmem:[%s1 + $0x518] sm:$0xff]
    %v245 = vld [vmem:[%s1 + $0x520] sm:$0xff]
    %v246 = vld [vmem:[%s1 + $0x528] sm:$0xff]
    %v247 = vld [vmem:[%s1 + $0x530] sm:$0xff]
    %v248 = vld [vmem:[%s1 + $0x538] sm:$0xff]
    %v249 = vld [vmem:[%s1 + $0x540] sm:$0xff]
    %v250 = vld [vmem:[%s1 + $0x548] sm:$0xff]
    %v251 = vld [vmem:[%s1 + $0x550] sm:$0xff]
    %v252 = vld [vmem:[%s1 + $0x558] sm:$0xff]
    %v253 = vld [vmem:[%s1 + $0x560] sm:$0xff]
    %v254 = vld [vmem:[%s1 + $0x568] sm:$0xff]
    %v255 = vld [vmem:[%s1 + $0x570] sm:$0xff]
    %v256 = vld [vmem:[%s1 + $0x578] sm:$0xff]
    %v257 = vld [vmem:[%s1 + $0x580] sm:$0xff]
    %v258 = vld [vmem:[%s1 + $0x588] sm:$0xff]
    %v259 = vld [vmem:[%s1 + $0x590] sm:$0xff]
    %v260 = vld [vmem:[%s1 + $0x598] sm:$0xff]
    %v261 = vld [vmem:[%s1 + $0x5a0] sm:$0xff]
    %v262 = vld [vmem:[%s1 + $0x5a8] sm:$0xff]
    %v263 = vld [vmem:[%s1 + $0x5b0] sm:$0xff]
    %v264 = vld [vmem:[%s1 + $0x5b8] sm:$0xff]
    %v265 = vld [vmem:[%s1 + $0x5c0] sm:$0xff]
    %v266 = vld [vmem:[%s1 + $0x5c8] sm:$0xff]
    %v267 = vld [vmem:[%s1 + $0x5d0] sm:$0xff]
    %v268 = vld [vmem:[%s1 + $0x5d8] sm:$0xff]
    %v269 = vld [vmem:[%s1 + $0x5e0] sm:$0xff]
    %v270 = vld [vmem:[%s1 + $0x5e8] sm:$0xff]
    %v271 = vld [vmem:[%s1 + $0x5f0] sm:$0xff]
    %v272 = vld [vmem:[%s1 + $0x5f8] sm:$0xff]
    %v273 = vld [vmem:[%s1 + $0x600] sm:$0xff]
    %v274 = vld [vmem:[%s1 + $0x608] sm:$0xff]
    %v275 = vld [vmem:[%s1 + $0x610] sm:$0xff]
    %v276 = vld [vmem:[%s1 + $0x618] sm:$0xff]
    %v277 = vld [vmem:[%s1 + $0x620] sm:$0xff]
    %v278 = vld [vmem:[%s1 + $0x628] sm:$0xff]
    %v279 = vld [vmem:[%s1 + $0x630] sm:$0xff]
    %v280 = vld [vmem:[%s1 + $0x638] sm:$0xff]
    %v281 = vld [vmem:[%s1 + $0x640] sm:$0xff]
    %v282 = vld [vmem:[%s1 + $0x648] sm:$0xff]
    %v283 = vld [vmem:[%s1 + $0x650] sm:$0xff]
    %v284 = vld [vmem:[%s1 + $0x658] sm:$0xff]
    %v285 = vld [vmem:[%s1 + $0x660] sm:$0xff]
    %v286 = vld [vmem:[%s1 + $0x668] sm:$0xff]
    %v287 = vld [vmem:[%s1 + $0x670] sm:$0xff]
    %v288 = vld [vmem:[%s1 + $0x678] sm:$0xff]
    %v289 = vld [vmem:[%s1 + $0x680] sm:$0xff]
    %v290 = vld [vmem:[%s1 + $0x688] sm:$0xff]
    %v291 = vld [vmem:[%s1 + $0x690] sm:$0xff]
    %v292 = vld [vmem:[%s1 + $0x698] sm:$0xff]
    %v293 = vld [vmem:[%s1 + $0x6a0] sm:$0xff]
    %v294 = vld [vmem:[%s1 + $0x6a8] sm:$0xff]
    %v295 = vld [vmem:[%s1 + $0x6b0] sm:$0xff]
    %v296 = vld [vmem:[%s1 + $0x6b8] sm:$0xff]
    %v297 = vld [vmem:[%s1 + $0x6c0] sm:$0xff]
    %v298 = vld [vmem:[%s1 + $0x6c8] sm:$0xff]
    %v299 = vld [vmem:[%s1 + $0x6d0] sm:$0xff]
    %v300 = vld [vmem:[%s1 + $0x6d8] sm:$0xff]
    %v301 = vld [vmem:[%s1 + $0x6e0] sm:$0xff]
    %v302 = vld [vmem:[%s1 + $0x6e8] sm:$0xff]
    %v303 = vld [vmem:[%s1 + $0x6f0] sm:$0xff]
    %v304 = vld [vmem:[%s1 + $0x6f8] sm:$0xff]
    %v305 = vld [vmem:[%s1 + $0x700] sm:$0xff]
    %v306 = vld [vmem:[%s1 + $0x708] sm:$0xff]
    %v307 = vld [vmem:[%s1 + $0x710] sm:$0xff]
    %v308 = vld [vmem:[%s1 + $0x718] sm:$0xff]
    %v309 = vld [vmem:[%s1 + $0x720] sm:$0xff]
    %v310 = vld [vmem:[%s1 + $0x728] sm:$0xff]
    %v311 = vld [vmem:[%s1 + $0x730] sm:$0xff]
    %v312 = vld [vmem:[%s1 + $0x738] sm:$0xff]
    %v313 = vld [vmem:[%s1 + $0x740] sm:$0xff]
    %v314 = vld [vmem:[%s1 + $0x748] sm:$0xff]
    %v315 = vld [vmem:[%s1 + $0x750] sm:$0xff]
    %v316 = vld [vmem:[%s1 + $0x758] sm:$0xff]
    %v317 = vld [vmem:[%s1 + $0x760] sm:$0xff]
    %v318 = vld [vmem:[%s1 + $0x768] sm:$0xff]
    %v319 = vld [vmem:[%s1 + $0x770] sm:$0xff]
    %v320 = vld [vmem:[%s1 + $0x778] sm:$0xff]
    %v321 = vld [vmem:[%s1 + $0x780] sm:$0xff]
    %v322 = vld [vmem:[%s1 + $0x788] sm:$0xff]
    %v323 = vld [vmem:[%s1 + $0x790] sm:$0xff]
    %v324 = vld [vmem:[%s1 + $0x798] sm:$0xff]
    %v325 = vld [vmem:[%s1 + $0x7a0] sm:$0xff]
    %v326 = vld [vmem:[%s1 + $0x7a8] sm:$0xff]
    %v327 = vld [vmem:[%s1 + $0x7b0] sm:$0xff]
    %v328 = vld [vmem:[%s1 + $0x7b8] sm:$0xff]
    %v329 = vld [vmem:[%s1 + $0x7c0] sm:$0xff]
    %v330 = vld [vmem:[%s1 + $0x7c8] sm:$0xff]
    %v331 = vld [vmem:[%s1 + $0x7d0] sm:$0xff]
    %v332 = vld [vmem:[%s1 + $0x7d8] sm:$0xff]
    %v333 = vld [vmem:[%s1 + $0x7e0] sm:$0xff]
    %v334 = vld [vmem:[%s1 + $0x7e8] sm:$0xff]
    %v335 = vld [vmem:[%s1 + $0x7f0] sm:$0xff]
    %v336 = vld [vmem:[%s1 + $0x7f8] sm:$0xff]
    %v337 = vld [vmem:[%s7] sm:$0x3]
    %v339 = vlaneseq
    %v340 = vshrl.u32 %v339, 7
    %v341 = vsub.s32 0, %v340
    %v342 = vrot.slane %v337, %v341
    %v343 = vlaneseq
    %v344 = vshrl.u32 %v343, 7
    %v345 = vsub.s32 1, %v344
    %v346 = vrot.slane %v337, %v345
    %v605 = vunpack.c.l.b16 %v81
    %v606 = vunpack.c.h.b16 %v81
    %v607 = vunpack.c.l.b16 %v82
    %v608 = vunpack.c.h.b16 %v82
    %v609 = vunpack.c.l.b16 %v83
    %v610 = vunpack.c.h.b16 %v83
    %v611 = vunpack.c.l.b16 %v84
    %v612 = vunpack.c.h.b16 %v84
    %v613 = vunpack.c.l.b16 %v85
    %v614 = vunpack.c.h.b16 %v85
    %v615 = vunpack.c.l.b16 %v86
    %v616 = vunpack.c.h.b16 %v86
    %v617 = vunpack.c.l.b16 %v87
    %v618 = vunpack.c.h.b16 %v87
    %v619 = vunpack.c.l.b16 %v88
    %v620 = vunpack.c.h.b16 %v88
    %v621 = vunpack.c.l.b16 %v89
    %v622 = vunpack.c.h.b16 %v89
    %v623 = vunpack.c.l.b16 %v90
    %v624 = vunpack.c.h.b16 %v90
    %v625 = vunpack.c.l.b16 %v91
    %v626 = vunpack.c.h.b16 %v91
    %v627 = vunpack.c.l.b16 %v92
    %v628 = vunpack.c.h.b16 %v92
    %v629 = vunpack.c.l.b16 %v93
    %v630 = vunpack.c.h.b16 %v93
    %v631 = vunpack.c.l.b16 %v94
    %v632 = vunpack.c.h.b16 %v94
    %v633 = vunpack.c.l.b16 %v95
    %v634 = vunpack.c.h.b16 %v95
    %v635 = vunpack.c.l.b16 %v96
    %v636 = vunpack.c.h.b16 %v96
    %v637 = vunpack.c.l.b16 %v97
    %v638 = vunpack.c.h.b16 %v97
    %v639 = vunpack.c.l.b16 %v98
    %v640 = vunpack.c.h.b16 %v98
    %v641 = vunpack.c.l.b16 %v99
    %v642 = vunpack.c.h.b16 %v99
    %v643 = vunpack.c.l.b16 %v100
    %v644 = vunpack.c.h.b16 %v100
    %v645 = vunpack.c.l.b16 %v101
    %v646 = vunpack.c.h.b16 %v101
    %v647 = vunpack.c.l.b16 %v102
    %v648 = vunpack.c.h.b16 %v102
    %v649 = vunpack.c.l.b16 %v103
    %v650 = vunpack.c.h.b16 %v103
    %v651 = vunpack.c.l.b16 %v104
    %v652 = vunpack.c.h.b16 %v104
    %v653 = vunpack.c.l.b16 %v105
    %v654 = vunpack.c.h.b16 %v105
    %v655 = vunpack.c.l.b16 %v106
    %v656 = vunpack.c.h.b16 %v106
    %v657 = vunpack.c.l.b16 %v107
    %v658 = vunpack.c.h.b16 %v107
    %v659 = vunpack.c.l.b16 %v108
    %v660 = vunpack.c.h.b16 %v108
    %v661 = vunpack.c.l.b16 %v109
    %v662 = vunpack.c.h.b16 %v109
    %v663 = vunpack.c.l.b16 %v110
    %v664 = vunpack.c.h.b16 %v110
    %v665 = vunpack.c.l.b16 %v111
    %v666 = vunpack.c.h.b16 %v111
    %v667 = vunpack.c.l.b16 %v112
    %v668 = vunpack.c.h.b16 %v112
    %v669 = vunpack.c.l.b16 %v113
    %v670 = vunpack.c.h.b16 %v113
    %v671 = vunpack.c.l.b16 %v114
    %v672 = vunpack.c.h.b16 %v114
    %v673 = vunpack.c.l.b16 %v115
    %v674 = vunpack.c.h.b16 %v115
    %v675 = vunpack.c.l.b16 %v116
    %v676 = vunpack.c.h.b16 %v116
    %v677 = vunpack.c.l.b16 %v117
    %v678 = vunpack.c.h.b16 %v117
    %v679 = vunpack.c.l.b16 %v118
    %v680 = vunpack.c.h.b16 %v118
    %v681 = vunpack.c.l.b16 %v119
    %v682 = vunpack.c.h.b16 %v119
    %v683 = vunpack.c.l.b16 %v120
    %v684 = vunpack.c.h.b16 %v120
    %v685 = vunpack.c.l.b16 %v121
    %v686 = vunpack.c.h.b16 %v121
    %v687 = vunpack.c.l.b16 %v122
    %v688 = vunpack.c.h.b16 %v122
    %v689 = vunpack.c.l.b16 %v123
    %v690 = vunpack.c.h.b16 %v123
    %v691 = vunpack.c.l.b16 %v124
    %v692 = vunpack.c.h.b16 %v124
    %v693 = vunpack.c.l.b16 %v125
    %v694 = vunpack.c.h.b16 %v125
    %v695 = vunpack.c.l.b16 %v126
    %v696 = vunpack.c.h.b16 %v126
    %v697 = vunpack.c.l.b16 %v127
    %v698 = vunpack.c.h.b16 %v127
    %v699 = vunpack.c.l.b16 %v128
    %v700 = vunpack.c.h.b16 %v128
    %v701 = vunpack.c.l.b16 %v129
    %v702 = vunpack.c.h.b16 %v129
    %v703 = vunpack.c.l.b16 %v130
    %v704 = vunpack.c.h.b16 %v130
    %v705 = vunpack.c.l.b16 %v131
    %v706 = vunpack.c.h.b16 %v131
    %v707 = vunpack.c.l.b16 %v132
    %v708 = vunpack.c.h.b16 %v132
    %v709 = vunpack.c.l.b16 %v133
    %v710 = vunpack.c.h.b16 %v133
    %v711 = vunpack.c.l.b16 %v134
    %v712 = vunpack.c.h.b16 %v134
    %v713 = vunpack.c.l.b16 %v135
    %v714 = vunpack.c.h.b16 %v135
    %v715 = vunpack.c.l.b16 %v136
    %v716 = vunpack.c.h.b16 %v136
    %v717 = vunpack.c.l.b16 %v137
    %v718 = vunpack.c.h.b16 %v137
    %v719 = vunpack.c.l.b16 %v138
    %v720 = vunpack.c.h.b16 %v138
    %v721 = vunpack.c.l.b16 %v139
    %v722 = vunpack.c.h.b16 %v139
    %v723 = vunpack.c.l.b16 %v140
    %v724 = vunpack.c.h.b16 %v140
    %v725 = vunpack.c.l.b16 %v141
    %v726 = vunpack.c.h.b16 %v141
    %v727 = vunpack.c.l.b16 %v142
    %v728 = vunpack.c.h.b16 %v142
    %v729 = vunpack.c.l.b16 %v143
    %v730 = vunpack.c.h.b16 %v143
    %v731 = vunpack.c.l.b16 %v144
    %v732 = vunpack.c.h.b16 %v144
    %v733 = vunpack.c.l.b16 %v145
    %v734 = vunpack.c.h.b16 %v145
    %v735 = vunpack.c.l.b16 %v146
    %v736 = vunpack.c.h.b16 %v146
    %v737 = vunpack.c.l.b16 %v147
    %v738 = vunpack.c.h.b16 %v147
    %v739 = vunpack.c.l.b16 %v148
    %v740 = vunpack.c.h.b16 %v148
    %v741 = vunpack.c.l.b16 %v149
    %v742 = vunpack.c.h.b16 %v149
    %v743 = vunpack.c.l.b16 %v150
    %v744 = vunpack.c.h.b16 %v150
    %v745 = vunpack.c.l.b16 %v151
    %v746 = vunpack.c.h.b16 %v151
    %v747 = vunpack.c.l.b16 %v152
    %v748 = vunpack.c.h.b16 %v152
    %v749 = vunpack.c.l.b16 %v153
    %v750 = vunpack.c.h.b16 %v153
    %v751 = vunpack.c.l.b16 %v154
    %v752 = vunpack.c.h.b16 %v154
    %v753 = vunpack.c.l.b16 %v155
    %v754 = vunpack.c.h.b16 %v155
    %v755 = vunpack.c.l.b16 %v156
    %v756 = vunpack.c.h.b16 %v156
    %v757 = vunpack.c.l.b16 %v157
    %v758 = vunpack.c.h.b16 %v157
    %v759 = vunpack.c.l.b16 %v158
    %v760 = vunpack.c.h.b16 %v158
    %v761 = vunpack.c.l.b16 %v159
    %v762 = vunpack.c.h.b16 %v159
    %v763 = vunpack.c.l.b16 %v160
    %v764 = vunpack.c.h.b16 %v160
    %v765 = vunpack.c.l.b16 %v161
    %v766 = vunpack.c.h.b16 %v161
    %v767 = vunpack.c.l.b16 %v162
    %v768 = vunpack.c.h.b16 %v162
    %v769 = vunpack.c.l.b16 %v163
    %v770 = vunpack.c.h.b16 %v163
    %v771 = vunpack.c.l.b16 %v164
    %v772 = vunpack.c.h.b16 %v164
    %v773 = vunpack.c.l.b16 %v165
    %v774 = vunpack.c.h.b16 %v165
    %v775 = vunpack.c.l.b16 %v166
    %v776 = vunpack.c.h.b16 %v166
    %v777 = vunpack.c.l.b16 %v167
    %v778 = vunpack.c.h.b16 %v167
    %v779 = vunpack.c.l.b16 %v168
    %v780 = vunpack.c.h.b16 %v168
    %v781 = vunpack.c.l.b16 %v169
    %v782 = vunpack.c.h.b16 %v169
    %v783 = vunpack.c.l.b16 %v170
    %v784 = vunpack.c.h.b16 %v170
    %v785 = vunpack.c.l.b16 %v171
    %v786 = vunpack.c.h.b16 %v171
    %v787 = vunpack.c.l.b16 %v172
    %v788 = vunpack.c.h.b16 %v172
    %v789 = vunpack.c.l.b16 %v173
    %v790 = vunpack.c.h.b16 %v173
    %v791 = vunpack.c.l.b16 %v174
    %v792 = vunpack.c.h.b16 %v174
    %v793 = vunpack.c.l.b16 %v175
    %v794 = vunpack.c.h.b16 %v175
    %v795 = vunpack.c.l.b16 %v176
    %v796 = vunpack.c.h.b16 %v176
    %v797 = vunpack.c.l.b16 %v177
    %v798 = vunpack.c.h.b16 %v177
    %v799 = vunpack.c.l.b16 %v178
    %v800 = vunpack.c.h.b16 %v178
    %v801 = vunpack.c.l.b16 %v179
    %v802 = vunpack.c.h.b16 %v179
    %v803 = vunpack.c.l.b16 %v180
    %v804 = vunpack.c.h.b16 %v180
    %v805 = vunpack.c.l.b16 %v181
    %v806 = vunpack.c.h.b16 %v181
    %v807 = vunpack.c.l.b16 %v182
    %v808 = vunpack.c.h.b16 %v182
    %v809 = vunpack.c.l.b16 %v183
    %v810 = vunpack.c.h.b16 %v183
    %v811 = vunpack.c.l.b16 %v184
    %v812 = vunpack.c.h.b16 %v184
    %v813 = vunpack.c.l.b16 %v185
    %v814 = vunpack.c.h.b16 %v185
    %v815 = vunpack.c.l.b16 %v186
    %v816 = vunpack.c.h.b16 %v186
    %v817 = vunpack.c.l.b16 %v187
    %v818 = vunpack.c.h.b16 %v187
    %v819 = vunpack.c.l.b16 %v188
    %v820 = vunpack.c.h.b16 %v188
    %v821 = vunpack.c.l.b16 %v189
    %v822 = vunpack.c.h.b16 %v189
    %v823 = vunpack.c.l.b16 %v190
    %v824 = vunpack.c.h.b16 %v190
    %v825 = vunpack.c.l.b16 %v191
    %v826 = vunpack.c.h.b16 %v191
    %v827 = vunpack.c.l.b16 %v192
    %v828 = vunpack.c.h.b16 %v192
    %v829 = vunpack.c.l.b16 %v193
    %v830 = vunpack.c.h.b16 %v193
    %v831 = vunpack.c.l.b16 %v194
    %v832 = vunpack.c.h.b16 %v194
    %v833 = vunpack.c.l.b16 %v195
    %v834 = vunpack.c.h.b16 %v195
    %v835 = vunpack.c.l.b16 %v196
    %v836 = vunpack.c.h.b16 %v196
    %v837 = vunpack.c.l.b16 %v197
    %v838 = vunpack.c.h.b16 %v197
    %v839 = vunpack.c.l.b16 %v198
    %v840 = vunpack.c.h.b16 %v198
    %v841 = vunpack.c.l.b16 %v199
    %v842 = vunpack.c.h.b16 %v199
    %v843 = vunpack.c.l.b16 %v200
    %v844 = vunpack.c.h.b16 %v200
    %v845 = vunpack.c.l.b16 %v201
    %v846 = vunpack.c.h.b16 %v201
    %v847 = vunpack.c.l.b16 %v202
    %v848 = vunpack.c.h.b16 %v202
    %v849 = vunpack.c.l.b16 %v203
    %v850 = vunpack.c.h.b16 %v203
    %v851 = vunpack.c.l.b16 %v204
    %v852 = vunpack.c.h.b16 %v204
    %v853 = vunpack.c.l.b16 %v205
    %v854 = vunpack.c.h.b16 %v205
    %v855 = vunpack.c.l.b16 %v206
    %v856 = vunpack.c.h.b16 %v206
    %v857 = vunpack.c.l.b16 %v207
    %v858 = vunpack.c.h.b16 %v207
    %v859 = vunpack.c.l.b16 %v208
    %v860 = vunpack.c.h.b16 %v208
    %v861 = vunpack.c.l.b16 %v209
    %v862 = vunpack.c.h.b16 %v209
    %v863 = vunpack.c.l.b16 %v210
    %v864 = vunpack.c.h.b16 %v210
    %v865 = vunpack.c.l.b16 %v211
    %v866 = vunpack.c.h.b16 %v211
    %v867 = vunpack.c.l.b16 %v212
    %v868 = vunpack.c.h.b16 %v212
    %v869 = vunpack.c.l.b16 %v213
    %v870 = vunpack.c.h.b16 %v213
    %v871 = vunpack.c.l.b16 %v214
    %v872 = vunpack.c.h.b16 %v214
    %v873 = vunpack.c.l.b16 %v215
    %v874 = vunpack.c.h.b16 %v215
    %v875 = vunpack.c.l.b16 %v216
    %v876 = vunpack.c.h.b16 %v216
    %v877 = vunpack.c.l.b16 %v217
    %v878 = vunpack.c.h.b16 %v217
    %v879 = vunpack.c.l.b16 %v218
    %v880 = vunpack.c.h.b16 %v218
    %v881 = vunpack.c.l.b16 %v219
    %v882 = vunpack.c.h.b16 %v219
    %v883 = vunpack.c.l.b16 %v220
    %v884 = vunpack.c.h.b16 %v220
    %v885 = vunpack.c.l.b16 %v221
    %v886 = vunpack.c.h.b16 %v221
    %v887 = vunpack.c.l.b16 %v222
    %v888 = vunpack.c.h.b16 %v222
    %v889 = vunpack.c.l.b16 %v223
    %v890 = vunpack.c.h.b16 %v223
    %v891 = vunpack.c.l.b16 %v224
    %v892 = vunpack.c.h.b16 %v224
    %v893 = vunpack.c.l.b16 %v225
    %v894 = vunpack.c.h.b16 %v225
    %v895 = vunpack.c.l.b16 %v226
    %v896 = vunpack.c.h.b16 %v226
    %v897 = vunpack.c.l.b16 %v227
    %v898 = vunpack.c.h.b16 %v227
    %v899 = vunpack.c.l.b16 %v228
    %v900 = vunpack.c.h.b16 %v228
    %v901 = vunpack.c.l.b16 %v229
    %v902 = vunpack.c.h.b16 %v229
    %v903 = vunpack.c.l.b16 %v230
    %v904 = vunpack.c.h.b16 %v230
    %v905 = vunpack.c.l.b16 %v231
    %v906 = vunpack.c.h.b16 %v231
    %v907 = vunpack.c.l.b16 %v232
    %v908 = vunpack.c.h.b16 %v232
    %v909 = vunpack.c.l.b16 %v233
    %v910 = vunpack.c.h.b16 %v233
    %v911 = vunpack.c.l.b16 %v234
    %v912 = vunpack.c.h.b16 %v234
    %v913 = vunpack.c.l.b16 %v235
    %v914 = vunpack.c.h.b16 %v235
    %v915 = vunpack.c.l.b16 %v236
    %v916 = vunpack.c.h.b16 %v236
    %v917 = vunpack.c.l.b16 %v237
    %v918 = vunpack.c.h.b16 %v237
    %v919 = vunpack.c.l.b16 %v238
    %v920 = vunpack.c.h.b16 %v238
    %v921 = vunpack.c.l.b16 %v239
    %v922 = vunpack.c.h.b16 %v239
    %v923 = vunpack.c.l.b16 %v240
    %v924 = vunpack.c.h.b16 %v240
    %v925 = vunpack.c.l.b16 %v241
    %v926 = vunpack.c.h.b16 %v241
    %v927 = vunpack.c.l.b16 %v242
    %v928 = vunpack.c.h.b16 %v242
    %v929 = vunpack.c.l.b16 %v243
    %v930 = vunpack.c.h.b16 %v243
    %v931 = vunpack.c.l.b16 %v244
    %v932 = vunpack.c.h.b16 %v244
    %v933 = vunpack.c.l.b16 %v245
    %v934 = vunpack.c.h.b16 %v245
    %v935 = vunpack.c.l.b16 %v246
    %v936 = vunpack.c.h.b16 %v246
    %v937 = vunpack.c.l.b16 %v247
    %v938 = vunpack.c.h.b16 %v247
    %v939 = vunpack.c.l.b16 %v248
    %v940 = vunpack.c.h.b16 %v248
    %v941 = vunpack.c.l.b16 %v249
    %v942 = vunpack.c.h.b16 %v249
    %v943 = vunpack.c.l.b16 %v250
    %v944 = vunpack.c.h.b16 %v250
    %v945 = vunpack.c.l.b16 %v251
    %v946 = vunpack.c.h.b16 %v251
    %v947 = vunpack.c.l.b16 %v252
    %v948 = vunpack.c.h.b16 %v252
    %v949 = vunpack.c.l.b16 %v253
    %v950 = vunpack.c.h.b16 %v253
    %v951 = vunpack.c.l.b16 %v254
    %v952 = vunpack.c.h.b16 %v254
    %v953 = vunpack.c.l.b16 %v255
    %v954 = vunpack.c.h.b16 %v255
    %v955 = vunpack.c.l.b16 %v256
    %v956 = vunpack.c.h.b16 %v256
    %v957 = vunpack.c.l.b16 %v257
    %v958 = vunpack.c.h.b16 %v257
    %v959 = vunpack.c.l.b16 %v258
    %v960 = vunpack.c.h.b16 %v258
    %v961 = vunpack.c.l.b16 %v259
    %v962 = vunpack.c.h.b16 %v259
    %v963 = vunpack.c.l.b16 %v260
    %v964 = vunpack.c.h.b16 %v260
    %v965 = vunpack.c.l.b16 %v261
    %v966 = vunpack.c.h.b16 %v261
    %v967 = vunpack.c.l.b16 %v262
    %v968 = vunpack.c.h.b16 %v262
    %v969 = vunpack.c.l.b16 %v263
    %v970 = vunpack.c.h.b16 %v263
    %v971 = vunpack.c.l.b16 %v264
    %v972 = vunpack.c.h.b16 %v264
    %v973 = vunpack.c.l.b16 %v265
    %v974 = vunpack.c.h.b16 %v265
    %v975 = vunpack.c.l.b16 %v266
    %v976 = vunpack.c.h.b16 %v266
    %v977 = vunpack.c.l.b16 %v267
    %v978 = vunpack.c.h.b16 %v267
    %v979 = vunpack.c.l.b16 %v268
    %v980 = vunpack.c.h.b16 %v268
    %v981 = vunpack.c.l.b16 %v269
    %v982 = vunpack.c.h.b16 %v269
    %v983 = vunpack.c.l.b16 %v270
    %v984 = vunpack.c.h.b16 %v270
    %v985 = vunpack.c.l.b16 %v271
    %v986 = vunpack.c.h.b16 %v271
    %v987 = vunpack.c.l.b16 %v272
    %v988 = vunpack.c.h.b16 %v272
    %v989 = vunpack.c.l.b16 %v273
    %v990 = vunpack.c.h.b16 %v273
    %v991 = vunpack.c.l.b16 %v274
    %v992 = vunpack.c.h.b16 %v274
    %v993 = vunpack.c.l.b16 %v275
    %v994 = vunpack.c.h.b16 %v275
    %v995 = vunpack.c.l.b16 %v276
    %v996 = vunpack.c.h.b16 %v276
    %v997 = vunpack.c.l.b16 %v277
    %v998 = vunpack.c.h.b16 %v277
    %v999 = vunpack.c.l.b16 %v278
    %v1000 = vunpack.c.h.b16 %v278
    %v1001 = vunpack.c.l.b16 %v279
    %v1002 = vunpack.c.h.b16 %v279
    %v1003 = vunpack.c.l.b16 %v280
    %v1004 = vunpack.c.h.b16 %v280
    %v1005 = vunpack.c.l.b16 %v281
    %v1006 = vunpack.c.h.b16 %v281
    %v1007 = vunpack.c.l.b16 %v282
    %v1008 = vunpack.c.h.b16 %v282
    %v1009 = vunpack.c.l.b16 %v283
    %v1010 = vunpack.c.h.b16 %v283
    %v1011 = vunpack.c.l.b16 %v284
    %v1012 = vunpack.c.h.b16 %v284
    %v1013 = vunpack.c.l.b16 %v285
    %v1014 = vunpack.c.h.b16 %v285
    %v1015 = vunpack.c.l.b16 %v286
    %v1016 = vunpack.c.h.b16 %v286
    %v1017 = vunpack.c.l.b16 %v287
    %v1018 = vunpack.c.h.b16 %v287
    %v1019 = vunpack.c.l.b16 %v288
    %v1020 = vunpack.c.h.b16 %v288
    %v1021 = vunpack.c.l.b16 %v289
    %v1022 = vunpack.c.h.b16 %v289
    %v1023 = vunpack.c.l.b16 %v290
    %v1024 = vunpack.c.h.b16 %v290
    %v1025 = vunpack.c.l.b16 %v291
    %v1026 = vunpack.c.h.b16 %v291
    %v1027 = vunpack.c.l.b16 %v292
    %v1028 = vunpack.c.h.b16 %v292
    %v1029 = vunpack.c.l.b16 %v293
    %v1030 = vunpack.c.h.b16 %v293
    %v1031 = vunpack.c.l.b16 %v294
    %v1032 = vunpack.c.h.b16 %v294
    %v1033 = vunpack.c.l.b16 %v295
    %v1034 = vunpack.c.h.b16 %v295
    %v1035 = vunpack.c.l.b16 %v296
    %v1036 = vunpack.c.h.b16 %v296
    %v1037 = vunpack.c.l.b16 %v297
    %v1038 = vunpack.c.h.b16 %v297
    %v1039 = vunpack.c.l.b16 %v298
    %v1040 = vunpack.c.h.b16 %v298
    %v1041 = vunpack.c.l.b16 %v299
    %v1042 = vunpack.c.h.b16 %v299
    %v1043 = vunpack.c.l.b16 %v300
    %v1044 = vunpack.c.h.b16 %v300
    %v1045 = vunpack.c.l.b16 %v301
    %v1046 = vunpack.c.h.b16 %v301
    %v1047 = vunpack.c.l.b16 %v302
    %v1048 = vunpack.c.h.b16 %v302
    %v1049 = vunpack.c.l.b16 %v303
    %v1050 = vunpack.c.h.b16 %v303
    %v1051 = vunpack.c.l.b16 %v304
    %v1052 = vunpack.c.h.b16 %v304
    %v1053 = vunpack.c.l.b16 %v305
    %v1054 = vunpack.c.h.b16 %v305
    %v1055 = vunpack.c.l.b16 %v306
    %v1056 = vunpack.c.h.b16 %v306
    %v1057 = vunpack.c.l.b16 %v307
    %v1058 = vunpack.c.h.b16 %v307
    %v1059 = vunpack.c.l.b16 %v308
    %v1060 = vunpack.c.h.b16 %v308
    %v1061 = vunpack.c.l.b16 %v309
    %v1062 = vunpack.c.h.b16 %v309
    %v1063 = vunpack.c.l.b16 %v310
    %v1064 = vunpack.c.h.b16 %v310
    %v1065 = vunpack.c.l.b16 %v311
    %v1066 = vunpack.c.h.b16 %v311
    %v1067 = vunpack.c.l.b16 %v312
    %v1068 = vunpack.c.h.b16 %v312
    %v1069 = vunpack.c.l.b16 %v313
    %v1070 = vunpack.c.h.b16 %v313
    %v1071 = vunpack.c.l.b16 %v314
    %v1072 = vunpack.c.h.b16 %v314
    %v1073 = vunpack.c.l.b16 %v315
    %v1074 = vunpack.c.h.b16 %v315
    %v1075 = vunpack.c.l.b16 %v316
    %v1076 = vunpack.c.h.b16 %v316
    %v1077 = vunpack.c.l.b16 %v317
    %v1078 = vunpack.c.h.b16 %v317
    %v1079 = vunpack.c.l.b16 %v318
    %v1080 = vunpack.c.h.b16 %v318
    %v1081 = vunpack.c.l.b16 %v319
    %v1082 = vunpack.c.h.b16 %v319
    %v1083 = vunpack.c.l.b16 %v320
    %v1084 = vunpack.c.h.b16 %v320
    %v1085 = vunpack.c.l.b16 %v321
    %v1086 = vunpack.c.h.b16 %v321
    %v1087 = vunpack.c.l.b16 %v322
    %v1088 = vunpack.c.h.b16 %v322
    %v1089 = vunpack.c.l.b16 %v323
    %v1090 = vunpack.c.h.b16 %v323
    %v1091 = vunpack.c.l.b16 %v324
    %v1092 = vunpack.c.h.b16 %v324
    %v1093 = vunpack.c.l.b16 %v325
    %v1094 = vunpack.c.h.b16 %v325
    %v1095 = vunpack.c.l.b16 %v326
    %v1096 = vunpack.c.h.b16 %v326
    %v1097 = vunpack.c.l.b16 %v327
    %v1098 = vunpack.c.h.b16 %v327
    %v1099 = vunpack.c.l.b16 %v328
    %v1100 = vunpack.c.h.b16 %v328
    %v1101 = vunpack.c.l.b16 %v329
    %v1102 = vunpack.c.h.b16 %v329
    %v1103 = vunpack.c.l.b16 %v330
    %v1104 = vunpack.c.h.b16 %v330
    %v1105 = vunpack.c.l.b16 %v331
    %v1106 = vunpack.c.h.b16 %v331
    %v1107 = vunpack.c.l.b16 %v332
    %v1108 = vunpack.c.h.b16 %v332
    %v1109 = vunpack.c.l.b16 %v333
    %v1110 = vunpack.c.h.b16 %v333
    %v1111 = vunpack.c.l.b16 %v334
    %v1112 = vunpack.c.h.b16 %v334
    %v1113 = vunpack.c.l.b16 %v335
    %v1114 = vunpack.c.h.b16 %v335
    %v1115 = vunpack.c.l.b16 %v336
    %v1116 = vunpack.c.h.b16 %v336
    %v1117 = vpack.c.b16 %v607, %v605
    %v1118 = vpack.c.b16 %v608, %v606
    %v1119 = vpack.c.b16 %v611, %v609
    %v1120 = vpack.c.b16 %v612, %v610
    %v1121 = vpack.c.b16 %v615, %v613
    %v1122 = vpack.c.b16 %v616, %v614
    %v1123 = vpack.c.b16 %v619, %v617
    %v1124 = vpack.c.b16 %v620, %v618
    %v1125 = vpack.c.b16 %v623, %v621
    %v1126 = vpack.c.b16 %v624, %v622
    %v1127 = vpack.c.b16 %v627, %v625
    %v1128 = vpack.c.b16 %v628, %v626
    %v1129 = vpack.c.b16 %v631, %v629
    %v1130 = vpack.c.b16 %v632, %v630
    %v1131 = vpack.c.b16 %v635, %v633
    %v1132 = vpack.c.b16 %v636, %v634
    %v1133 = vpack.c.b16 %v639, %v637
    %v1134 = vpack.c.b16 %v640, %v638
    %v1135 = vpack.c.b16 %v643, %v641
    %v1136 = vpack.c.b16 %v644, %v642
    %v1137 = vpack.c.b16 %v647, %v645
    %v1138 = vpack.c.b16 %v648, %v646
    %v1139 = vpack.c.b16 %v651, %v649
    %v1140 = vpack.c.b16 %v652, %v650
    %v1141 = vpack.c.b16 %v655, %v653
    %v1142 = vpack.c.b16 %v656, %v654
    %v1143 = vpack.c.b16 %v659, %v657
    %v1144 = vpack.c.b16 %v660, %v658
    %v1145 = vpack.c.b16 %v663, %v661
    %v1146 = vpack.c.b16 %v664, %v662
    %v1147 = vpack.c.b16 %v667, %v665
    %v1148 = vpack.c.b16 %v668, %v666
    %v1149 = vpack.c.b16 %v671, %v669
    %v1150 = vpack.c.b16 %v672, %v670
    %v1151 = vpack.c.b16 %v675, %v673
    %v1152 = vpack.c.b16 %v676, %v674
    %v1153 = vpack.c.b16 %v679, %v677
    %v1154 = vpack.c.b16 %v680, %v678
    %v1155 = vpack.c.b16 %v683, %v681
    %v1156 = vpack.c.b16 %v684, %v682
    %v1157 = vpack.c.b16 %v687, %v685
    %v1158 = vpack.c.b16 %v688, %v686
    %v1159 = vpack.c.b16 %v691, %v689
    %v1160 = vpack.c.b16 %v692, %v690
    %v1161 = vpack.c.b16 %v695, %v693
    %v1162 = vpack.c.b16 %v696, %v694
    %v1163 = vpack.c.b16 %v699, %v697
    %v1164 = vpack.c.b16 %v700, %v698
    %v1165 = vpack.c.b16 %v703, %v701
    %v1166 = vpack.c.b16 %v704, %v702
    %v1167 = vpack.c.b16 %v707, %v705
    %v1168 = vpack.c.b16 %v708, %v706
    %v1169 = vpack.c.b16 %v711, %v709
    %v1170 = vpack.c.b16 %v712, %v710
    %v1171 = vpack.c.b16 %v715, %v713
    %v1172 = vpack.c.b16 %v716, %v714
    %v1173 = vpack.c.b16 %v719, %v717
    %v1174 = vpack.c.b16 %v720, %v718
    %v1175 = vpack.c.b16 %v723, %v721
    %v1176 = vpack.c.b16 %v724, %v722
    %v1177 = vpack.c.b16 %v727, %v725
    %v1178 = vpack.c.b16 %v728, %v726
    %v1179 = vpack.c.b16 %v731, %v729
    %v1180 = vpack.c.b16 %v732, %v730
    %v1181 = vpack.c.b16 %v735, %v733
    %v1182 = vpack.c.b16 %v736, %v734
    %v1183 = vpack.c.b16 %v739, %v737
    %v1184 = vpack.c.b16 %v740, %v738
    %v1185 = vpack.c.b16 %v743, %v741
    %v1186 = vpack.c.b16 %v744, %v742
    %v1187 = vpack.c.b16 %v747, %v745
    %v1188 = vpack.c.b16 %v748, %v746
    %v1189 = vpack.c.b16 %v751, %v749
    %v1190 = vpack.c.b16 %v752, %v750
    %v1191 = vpack.c.b16 %v755, %v753
    %v1192 = vpack.c.b16 %v756, %v754
    %v1193 = vpack.c.b16 %v759, %v757
    %v1194 = vpack.c.b16 %v760, %v758
    %v1195 = vpack.c.b16 %v763, %v761
    %v1196 = vpack.c.b16 %v764, %v762
    %v1197 = vpack.c.b16 %v767, %v765
    %v1198 = vpack.c.b16 %v768, %v766
    %v1199 = vpack.c.b16 %v771, %v769
    %v1200 = vpack.c.b16 %v772, %v770
    %v1201 = vpack.c.b16 %v775, %v773
    %v1202 = vpack.c.b16 %v776, %v774
    %v1203 = vpack.c.b16 %v779, %v777
    %v1204 = vpack.c.b16 %v780, %v778
    %v1205 = vpack.c.b16 %v783, %v781
    %v1206 = vpack.c.b16 %v784, %v782
    %v1207 = vpack.c.b16 %v787, %v785
    %v1208 = vpack.c.b16 %v788, %v786
    %v1209 = vpack.c.b16 %v791, %v789
    %v1210 = vpack.c.b16 %v792, %v790
    %v1211 = vpack.c.b16 %v795, %v793
    %v1212 = vpack.c.b16 %v796, %v794
    %v1213 = vpack.c.b16 %v799, %v797
    %v1214 = vpack.c.b16 %v800, %v798
    %v1215 = vpack.c.b16 %v803, %v801
    %v1216 = vpack.c.b16 %v804, %v802
    %v1217 = vpack.c.b16 %v807, %v805
    %v1218 = vpack.c.b16 %v808, %v806
    %v1219 = vpack.c.b16 %v811, %v809
    %v1220 = vpack.c.b16 %v812, %v810
    %v1221 = vpack.c.b16 %v815, %v813
    %v1222 = vpack.c.b16 %v816, %v814
    %v1223 = vpack.c.b16 %v819, %v817
    %v1224 = vpack.c.b16 %v820, %v818
    %v1225 = vpack.c.b16 %v823, %v821
    %v1226 = vpack.c.b16 %v824, %v822
    %v1227 = vpack.c.b16 %v827, %v825
    %v1228 = vpack.c.b16 %v828, %v826
    %v1229 = vpack.c.b16 %v831, %v829
    %v1230 = vpack.c.b16 %v832, %v830
    %v1231 = vpack.c.b16 %v835, %v833
    %v1232 = vpack.c.b16 %v836, %v834
    %v1233 = vpack.c.b16 %v839, %v837
    %v1234 = vpack.c.b16 %v840, %v838
    %v1235 = vpack.c.b16 %v843, %v841
    %v1236 = vpack.c.b16 %v844, %v842
    %v1237 = vpack.c.b16 %v847, %v845
    %v1238 = vpack.c.b16 %v848, %v846
    %v1239 = vpack.c.b16 %v851, %v849
    %v1240 = vpack.c.b16 %v852, %v850
    %v1241 = vpack.c.b16 %v855, %v853
    %v1242 = vpack.c.b16 %v856, %v854
    %v1243 = vpack.c.b16 %v859, %v857
    %v1244 = vpack.c.b16 %v860, %v858
    %v1245 = vpack.c.b16 %v863, %v861
    %v1246 = vpack.c.b16 %v864, %v862
    %v1247 = vpack.c.b16 %v867, %v865
    %v1248 = vpack.c.b16 %v868, %v866
    %v1249 = vpack.c.b16 %v871, %v869
    %v1250 = vpack.c.b16 %v872, %v870
    %v1251 = vpack.c.b16 %v875, %v873
    %v1252 = vpack.c.b16 %v876, %v874
    %v1253 = vpack.c.b16 %v879, %v877
    %v1254 = vpack.c.b16 %v880, %v878
    %v1255 = vpack.c.b16 %v883, %v881
    %v1256 = vpack.c.b16 %v884, %v882
    %v1257 = vpack.c.b16 %v887, %v885
    %v1258 = vpack.c.b16 %v888, %v886
    %v1259 = vpack.c.b16 %v891, %v889
    %v1260 = vpack.c.b16 %v892, %v890
    %v1261 = vpack.c.b16 %v895, %v893
    %v1262 = vpack.c.b16 %v896, %v894
    %v1263 = vpack.c.b16 %v899, %v897
    %v1264 = vpack.c.b16 %v900, %v898
    %v1265 = vpack.c.b16 %v903, %v901
    %v1266 = vpack.c.b16 %v904, %v902
    %v1267 = vpack.c.b16 %v907, %v905
    %v1268 = vpack.c.b16 %v908, %v906
    %v1269 = vpack.c.b16 %v911, %v909
    %v1270 = vpack.c.b16 %v912, %v910
    %v1271 = vpack.c.b16 %v915, %v913
    %v1272 = vpack.c.b16 %v916, %v914
    %v1273 = vpack.c.b16 %v919, %v917
    %v1274 = vpack.c.b16 %v920, %v918
    %v1275 = vpack.c.b16 %v923, %v921
    %v1276 = vpack.c.b16 %v924, %v922
    %v1277 = vpack.c.b16 %v927, %v925
    %v1278 = vpack.c.b16 %v928, %v926
    %v1279 = vpack.c.b16 %v931, %v929
    %v1280 = vpack.c.b16 %v932, %v930
    %v1281 = vpack.c.b16 %v935, %v933
    %v1282 = vpack.c.b16 %v936, %v934
    %v1283 = vpack.c.b16 %v939, %v937
    %v1284 = vpack.c.b16 %v940, %v938
    %v1285 = vpack.c.b16 %v943, %v941
    %v1286 = vpack.c.b16 %v944, %v942
    %v1287 = vpack.c.b16 %v947, %v945
    %v1288 = vpack.c.b16 %v948, %v946
    %v1289 = vpack.c.b16 %v951, %v949
    %v1290 = vpack.c.b16 %v952, %v950
    %v1291 = vpack.c.b16 %v955, %v953
    %v1292 = vpack.c.b16 %v956, %v954
    %v1293 = vpack.c.b16 %v959, %v957
    %v1294 = vpack.c.b16 %v960, %v958
    %v1295 = vpack.c.b16 %v963, %v961
    %v1296 = vpack.c.b16 %v964, %v962
    %v1297 = vpack.c.b16 %v967, %v965
    %v1298 = vpack.c.b16 %v968, %v966
    %v1299 = vpack.c.b16 %v971, %v969
    %v1300 = vpack.c.b16 %v972, %v970
    %v1301 = vpack.c.b16 %v975, %v973
    %v1302 = vpack.c.b16 %v976, %v974
    %v1303 = vpack.c.b16 %v979, %v977
    %v1304 = vpack.c.b16 %v980, %v978
    %v1305 = vpack.c.b16 %v983, %v981
    %v1306 = vpack.c.b16 %v984, %v982
    %v1307 = vpack.c.b16 %v987, %v985
    %v1308 = vpack.c.b16 %v988, %v986
    %v1309 = vpack.c.b16 %v991, %v989
    %v1310 = vpack.c.b16 %v992, %v990
    %v1311 = vpack.c.b16 %v995, %v993
    %v1312 = vpack.c.b16 %v996, %v994
    %v1313 = vpack.c.b16 %v999, %v997
    %v1314 = vpack.c.b16 %v1000, %v998
    %v1315 = vpack.c.b16 %v1003, %v1001
    %v1316 = vpack.c.b16 %v1004, %v1002
    %v1317 = vpack.c.b16 %v1007, %v1005
    %v1318 = vpack.c.b16 %v1008, %v1006
    %v1319 = vpack.c.b16 %v1011, %v1009
    %v1320 = vpack.c.b16 %v1012, %v1010
    %v1321 = vpack.c.b16 %v1015, %v1013
    %v1322 = vpack.c.b16 %v1016, %v1014
    %v1323 = vpack.c.b16 %v1019, %v1017
    %v1324 = vpack.c.b16 %v1020, %v1018
    %v1325 = vpack.c.b16 %v1023, %v1021
    %v1326 = vpack.c.b16 %v1024, %v1022
    %v1327 = vpack.c.b16 %v1027, %v1025
    %v1328 = vpack.c.b16 %v1028, %v1026
    %v1329 = vpack.c.b16 %v1031, %v1029
    %v1330 = vpack.c.b16 %v1032, %v1030
    %v1331 = vpack.c.b16 %v1035, %v1033
    %v1332 = vpack.c.b16 %v1036, %v1034
    %v1333 = vpack.c.b16 %v1039, %v1037
    %v1334 = vpack.c.b16 %v1040, %v1038
    %v1335 = vpack.c.b16 %v1043, %v1041
    %v1336 = vpack.c.b16 %v1044, %v1042
    %v1337 = vpack.c.b16 %v1047, %v1045
    %v1338 = vpack.c.b16 %v1048, %v1046
    %v1339 = vpack.c.b16 %v1051, %v1049
    %v1340 = vpack.c.b16 %v1052, %v1050
    %v1341 = vpack.c.b16 %v1055, %v1053
    %v1342 = vpack.c.b16 %v1056, %v1054
    %v1343 = vpack.c.b16 %v1059, %v1057
    %v1344 = vpack.c.b16 %v1060, %v1058
    %v1345 = vpack.c.b16 %v1063, %v1061
    %v1346 = vpack.c.b16 %v1064, %v1062
    %v1347 = vpack.c.b16 %v1067, %v1065
    %v1348 = vpack.c.b16 %v1068, %v1066
    %v1349 = vpack.c.b16 %v1071, %v1069
    %v1350 = vpack.c.b16 %v1072, %v1070
    %v1351 = vpack.c.b16 %v1075, %v1073
    %v1352 = vpack.c.b16 %v1076, %v1074
    %v1353 = vpack.c.b16 %v1079, %v1077
    %v1354 = vpack.c.b16 %v1080, %v1078
    %v1355 = vpack.c.b16 %v1083, %v1081
    %v1356 = vpack.c.b16 %v1084, %v1082
    %v1357 = vpack.c.b16 %v1087, %v1085
    %v1358 = vpack.c.b16 %v1088, %v1086
    %v1359 = vpack.c.b16 %v1091, %v1089
    %v1360 = vpack.c.b16 %v1092, %v1090
    %v1361 = vpack.c.b16 %v1095, %v1093
    %v1362 = vpack.c.b16 %v1096, %v1094
    %v1363 = vpack.c.b16 %v1099, %v1097
    %v1364 = vpack.c.b16 %v1100, %v1098
    %v1365 = vpack.c.b16 %v1103, %v1101
    %v1366 = vpack.c.b16 %v1104, %v1102
    %v1367 = vpack.c.b16 %v1107, %v1105
    %v1368 = vpack.c.b16 %v1108, %v1106
    %v1369 = vpack.c.b16 %v1111, %v1109
    %v1370 = vpack.c.b16 %v1112, %v1110
    %v1371 = vpack.c.b16 %v1115, %v1113
    %v1372 = vpack.c.b16 %v1116, %v1114
    %1629 = vmatprep.subr.bf16.mxu0 %v1132
    %1630 = vmatpush1.bf16.msra.mxu0 %v1131
    %1631 = vmatprep.subr.bf16.mxu0 %v1130
    %1632 = vmatpush1.bf16.msra.mxu0 %v1129
    %1633 = vmatprep.subr.bf16.mxu0 %v1128
    %1634 = vmatpush1.bf16.msra.mxu0 %v1127
    %1635 = vmatprep.subr.bf16.mxu0 %v1126
    %1636 = vmatpush1.bf16.msra.mxu0 %v1125
    %1637 = vmatprep.subr.bf16.mxu0 %v1124
    %1638 = vmatpush1.bf16.msra.mxu0 %v1123
    %1639 = vmatprep.subr.bf16.mxu0 %v1122
    %1640 = vmatpush1.bf16.msra.mxu0 %v1121
    %1641 = vmatprep.subr.bf16.mxu0 %v1120
    %1642 = vmatpush1.bf16.msra.mxu0 %v1119
    %1643 = vmatprep.subr.bf16.mxu0 %v1118
    %1644 = vmatpush1.bf16.msra.mxu0 %v1117
    %1645 = vmatprep.subr.bf16.mxu0 %v1148
    %1646 = vmatpush2.bf16.msra.mxu0 %v1147
    %1647 = vmatprep.subr.bf16.mxu0 %v1146
    %1648 = vmatpush2.bf16.msra.mxu0 %v1145
    %1649 = vmatprep.subr.bf16.mxu0 %v1144
    %1650 = vmatpush2.bf16.msra.mxu0 %v1143
    %1651 = vmatprep.subr.bf16.mxu0 %v1142
    %1652 = vmatpush2.bf16.msra.mxu0 %v1141
    %1653 = vmatprep.subr.bf16.mxu0 %v1140
    %1654 = vmatpush2.bf16.msra.mxu0 %v1139
    %1655 = vmatprep.subr.bf16.mxu0 %v1138
    %1656 = vmatpush2.bf16.msra.mxu0 %v1137
    %1657 = vmatprep.subr.bf16.mxu0 %v1136
    %1658 = vmatpush2.bf16.msra.mxu0 %v1135
    %1659 = vmatprep.subr.bf16.mxu0 %v1134
    %1660 = vmatpush2.bf16.msra.mxu0 %v1133
    %1661 = vmatprep.mubr.bf16.mxu0 %v66
    %1662 = vmatmul.mubr.bf16.gmra.mxu0 %v65
    %v1663 = vpop.f32.mrf.mxu0
    %v1664 = vadd.f32 %v342, %v1663
    %v1665 = vpop.f32.mrf.mxu0
    %v1666 = vadd.f32 %v346, %v1665
    %v1667 = vpop.f32.mrf.mxu0
    %v1668 = vadd.f32 %v342, %v1667
    %v1669 = vpop.f32.mrf.mxu0
    %v1670 = vadd.f32 %v346, %v1669
    %1671 = vdwg.mxu0
    %1672 = vmatprep.subr.bf16.mxu0 %v1164
    %1673 = vmatpush1.bf16.msra.mxu0 %v1163
    %1674 = vmatprep.subr.bf16.mxu0 %v1162
    %1675 = vmatpush1.bf16.msra.mxu0 %v1161
    %1676 = vmatprep.subr.bf16.mxu0 %v1160
    %1677 = vmatpush1.bf16.msra.mxu0 %v1159
    %1678 = vmatprep.subr.bf16.mxu0 %v1158
    %1679 = vmatpush1.bf16.msra.mxu0 %v1157
    %1680 = vmatprep.subr.bf16.mxu0 %v1156
    %1681 = vmatpush1.bf16.msra.mxu0 %v1155
    %1682 = vmatprep.subr.bf16.mxu0 %v1154
    %1683 = vmatpush1.bf16.msra.mxu0 %v1153
    %1684 = vmatprep.subr.bf16.mxu0 %v1152
    %1685 = vmatpush1.bf16.msra.mxu0 %v1151
    %1686 = vmatprep.subr.bf16.mxu0 %v1150
    %1687 = vmatpush1.bf16.msra.mxu0 %v1149
    %1688 = vmatprep.subr.bf16.mxu0 %v1180
    %1689 = vmatpush2.bf16.msra.mxu0 %v1179
    %1690 = vmatprep.subr.bf16.mxu0 %v1178
    %1691 = vmatpush2.bf16.msra.mxu0 %v1177
    %1692 = vmatprep.subr.bf16.mxu0 %v1176
    %1693 = vmatpush2.bf16.msra.mxu0 %v1175
    %1694 = vmatprep.subr.bf16.mxu0 %v1174
    %1695 = vmatpush2.bf16.msra.mxu0 %v1173
    %1696 = vmatprep.subr.bf16.mxu0 %v1172
    %1697 = vmatpush2.bf16.msra.mxu0 %v1171
    %1698 = vmatprep.subr.bf16.mxu0 %v1170
    %1699 = vmatpush2.bf16.msra.mxu0 %v1169
    %1700 = vmatprep.subr.bf16.mxu0 %v1168
    %1701 = vmatpush2.bf16.msra.mxu0 %v1167
    %1702 = vmatprep.subr.bf16.mxu0 %v1166
    %1703 = vmatpush2.bf16.msra.mxu0 %v1165
    %1704 = vmatprep.mubr.bf16.mxu0 %v68
    %1705 = vmatmul.mubr.bf16.gmra.mxu0 %v67
    %v1706 = vpop.f32.mrf.mxu0
    %v1707 = vadd.f32 %v1664, %v1706
    %v1708 = vpop.f32.mrf.mxu0
    %v1709 = vadd.f32 %v1666, %v1708
    %v1710 = vpop.f32.mrf.mxu0
    %v1711 = vadd.f32 %v1668, %v1710
    %v1712 = vpop.f32.mrf.mxu0
    %v1713 = vadd.f32 %v1670, %v1712
    %1714 = vdwg.mxu0
    %1715 = vmatprep.subr.bf16.mxu0 %v1196
    %1716 = vmatpush1.bf16.msra.mxu0 %v1195
    %1717 = vmatprep.subr.bf16.mxu0 %v1194
    %1718 = vmatpush1.bf16.msra.mxu0 %v1193
    %1719 = vmatprep.subr.bf16.mxu0 %v1192
    %1720 = vmatpush1.bf16.msra.mxu0 %v1191
    %1721 = vmatprep.subr.bf16.mxu0 %v1190
    %1722 = vmatpush1.bf16.msra.mxu0 %v1189
    %1723 = vmatprep.subr.bf16.mxu0 %v1188
    %1724 = vmatpush1.bf16.msra.mxu0 %v1187
    %1725 = vmatprep.subr.bf16.mxu0 %v1186
    %1726 = vmatpush1.bf16.msra.mxu0 %v1185
    %1727 = vmatprep.subr.bf16.mxu0 %v1184
    %1728 = vmatpush1.bf16.msra.mxu0 %v1183
    %1729 = vmatprep.subr.bf16.mxu0 %v1182
    %1730 = vmatpush1.bf16.msra.mxu0 %v1181
    %1731 = vmatprep.subr.bf16.mxu0 %v1212
    %1732 = vmatpush2.bf16.msra.mxu0 %v1211
    %1733 = vmatprep.subr.bf16.mxu0 %v1210
    %1734 = vmatpush2.bf16.msra.mxu0 %v1209
    %1735 = vmatprep.subr.bf16.mxu0 %v1208
    %1736 = vmatpush2.bf16.msra.mxu0 %v1207
    %1737 = vmatprep.subr.bf16.mxu0 %v1206
    %1738 = vmatpush2.bf16.msra.mxu0 %v1205
    %1739 = vmatprep.subr.bf16.mxu0 %v1204
    %1740 = vmatpush2.bf16.msra.mxu0 %v1203
    %1741 = vmatprep.subr.bf16.mxu0 %v1202
    %1742 = vmatpush2.bf16.msra.mxu0 %v1201
    %1743 = vmatprep.subr.bf16.mxu0 %v1200
    %1744 = vmatpush2.bf16.msra.mxu0 %v1199
    %1745 = vmatprep.subr.bf16.mxu0 %v1198
    %1746 = vmatpush2.bf16.msra.mxu0 %v1197
    %1747 = vmatprep.mubr.bf16.mxu0 %v70
    %1748 = vmatmul.mubr.bf16.gmra.mxu0 %v69
    %v1749 = vpop.f32.mrf.mxu0
    %v1750 = vadd.f32 %v1707, %v1749
    %v1751 = vpop.f32.mrf.mxu0
    %v1752 = vadd.f32 %v1709, %v1751
    %v1753 = vpop.f32.mrf.mxu0
    %v1754 = vadd.f32 %v1711, %v1753
    %v1755 = vpop.f32.mrf.mxu0
    %v1756 = vadd.f32 %v1713, %v1755
    %1757 = vdwg.mxu0
    %1758 = vmatprep.subr.bf16.mxu0 %v1228
    %1759 = vmatpush1.bf16.msra.mxu0 %v1227
    %1760 = vmatprep.subr.bf16.mxu0 %v1226
    %1761 = vmatpush1.bf16.msra.mxu0 %v1225
    %1762 = vmatprep.subr.bf16.mxu0 %v1224
    %1763 = vmatpush1.bf16.msra.mxu0 %v1223
    %1764 = vmatprep.subr.bf16.mxu0 %v1222
    %1765 = vmatpush1.bf16.msra.mxu0 %v1221
    %1766 = vmatprep.subr.bf16.mxu0 %v1220
    %1767 = vmatpush1.bf16.msra.mxu0 %v1219
    %1768 = vmatprep.subr.bf16.mxu0 %v1218
    %1769 = vmatpush1.bf16.msra.mxu0 %v1217
    %1770 = vmatprep.subr.bf16.mxu0 %v1216
    %1771 = vmatpush1.bf16.msra.mxu0 %v1215
    %1772 = vmatprep.subr.bf16.mxu0 %v1214
    %1773 = vmatpush1.bf16.msra.mxu0 %v1213
    %1774 = vmatprep.subr.bf16.mxu0 %v1244
    %1775 = vmatpush2.bf16.msra.mxu0 %v1243
    %1776 = vmatprep.subr.bf16.mxu0 %v1242
    %1777 = vmatpush2.bf16.msra.mxu0 %v1241
    %1778 = vmatprep.subr.bf16.mxu0 %v1240
    %1779 = vmatpush2.bf16.msra.mxu0 %v1239
    %1780 = vmatprep.subr.bf16.mxu0 %v1238
    %1781 = vmatpush2.bf16.msra.mxu0 %v1237
    %1782 = vmatprep.subr.bf16.mxu0 %v1236
    %1783 = vmatpush2.bf16.msra.mxu0 %v1235
    %1784 = vmatprep.subr.bf16.mxu0 %v1234
    %1785 = vmatpush2.bf16.msra.mxu0 %v1233
    %1786 = vmatprep.subr.bf16.mxu0 %v1232
    %1787 = vmatpush2.bf16.msra.mxu0 %v1231
    %1788 = vmatprep.subr.bf16.mxu0 %v1230
    %1789 = vmatpush2.bf16.msra.mxu0 %v1229
    %1790 = vmatprep.mubr.bf16.mxu0 %v72
    %1791 = vmatmul.mubr.bf16.gmra.mxu0 %v71
    %v1792 = vpop.f32.mrf.mxu0
    %v1793 = vadd.f32 %v1750, %v1792
    %v1794 = vpop.f32.mrf.mxu0
    %v1795 = vadd.f32 %v1752, %v1794
    %v1796 = vpop.f32.mrf.mxu0
    %v1797 = vadd.f32 %v1754, %v1796
    %v1798 = vpop.f32.mrf.mxu0
    %v1799 = vadd.f32 %v1756, %v1798
    %1800 = vdwg.mxu0
    %1801 = vmatprep.subr.bf16.mxu0 %v1260
    %1802 = vmatpush1.bf16.msra.mxu0 %v1259
    %1803 = vmatprep.subr.bf16.mxu0 %v1258
    %1804 = vmatpush1.bf16.msra.mxu0 %v1257
    %1805 = vmatprep.subr.bf16.mxu0 %v1256
    %1806 = vmatpush1.bf16.msra.mxu0 %v1255
    %1807 = vmatprep.subr.bf16.mxu0 %v1254
    %1808 = vmatpush1.bf16.msra.mxu0 %v1253
    %1809 = vmatprep.subr.bf16.mxu0 %v1252
    %1810 = vmatpush1.bf16.msra.mxu0 %v1251
    %1811 = vmatprep.subr.bf16.mxu0 %v1250
    %1812 = vmatpush1.bf16.msra.mxu0 %v1249
    %1813 = vmatprep.subr.bf16.mxu0 %v1248
    %1814 = vmatpush1.bf16.msra.mxu0 %v1247
    %1815 = vmatprep.subr.bf16.mxu0 %v1246
    %1816 = vmatpush1.bf16.msra.mxu0 %v1245
    %1817 = vmatprep.subr.bf16.mxu0 %v1276
    %1818 = vmatpush2.bf16.msra.mxu0 %v1275
    %1819 = vmatprep.subr.bf16.mxu0 %v1274
    %1820 = vmatpush2.bf16.msra.mxu0 %v1273
    %1821 = vmatprep.subr.bf16.mxu0 %v1272
    %1822 = vmatpush2.bf16.msra.mxu0 %v1271
    %1823 = vmatprep.subr.bf16.mxu0 %v1270
    %1824 = vmatpush2.bf16.msra.mxu0 %v1269
    %1825 = vmatprep.subr.bf16.mxu0 %v1268
    %1826 = vmatpush2.bf16.msra.mxu0 %v1267
    %1827 = vmatprep.subr.bf16.mxu0 %v1266
    %1828 = vmatpush2.bf16.msra.mxu0 %v1265
    %1829 = vmatprep.subr.bf16.mxu0 %v1264
    %1830 = vmatpush2.bf16.msra.mxu0 %v1263
    %1831 = vmatprep.subr.bf16.mxu0 %v1262
    %1832 = vmatpush2.bf16.msra.mxu0 %v1261
    %1833 = vmatprep.mubr.bf16.mxu0 %v74
    %1834 = vmatmul.mubr.bf16.gmra.mxu0 %v73
    %v1835 = vpop.f32.mrf.mxu0
    %v1836 = vadd.f32 %v1793, %v1835
    %v1837 = vpop.f32.mrf.mxu0
    %v1838 = vadd.f32 %v1795, %v1837
    %v1839 = vpop.f32.mrf.mxu0
    %v1840 = vadd.f32 %v1797, %v1839
    %v1841 = vpop.f32.mrf.mxu0
    %v1842 = vadd.f32 %v1799, %v1841
    %1843 = vdwg.mxu0
    %1844 = vmatprep.subr.bf16.mxu0 %v1292
    %1845 = vmatpush1.bf16.msra.mxu0 %v1291
    %1846 = vmatprep.subr.bf16.mxu0 %v1290
    %1847 = vmatpush1.bf16.msra.mxu0 %v1289
    %1848 = vmatprep.subr.bf16.mxu0 %v1288
    %1849 = vmatpush1.bf16.msra.mxu0 %v1287
    %1850 = vmatprep.subr.bf16.mxu0 %v1286
    %1851 = vmatpush1.bf16.msra.mxu0 %v1285
    %1852 = vmatprep.subr.bf16.mxu0 %v1284
    %1853 = vmatpush1.bf16.msra.mxu0 %v1283
    %1854 = vmatprep.subr.bf16.mxu0 %v1282
    %1855 = vmatpush1.bf16.msra.mxu0 %v1281
    %1856 = vmatprep.subr.bf16.mxu0 %v1280
    %1857 = vmatpush1.bf16.msra.mxu0 %v1279
    %1858 = vmatprep.subr.bf16.mxu0 %v1278
    %1859 = vmatpush1.bf16.msra.mxu0 %v1277
    %1860 = vmatprep.subr.bf16.mxu0 %v1308
    %1861 = vmatpush2.bf16.msra.mxu0 %v1307
    %1862 = vmatprep.subr.bf16.mxu0 %v1306
    %1863 = vmatpush2.bf16.msra.mxu0 %v1305
    %1864 = vmatprep.subr.bf16.mxu0 %v1304
    %1865 = vmatpush2.bf16.msra.mxu0 %v1303
    %1866 = vmatprep.subr.bf16.mxu0 %v1302
    %1867 = vmatpush2.bf16.msra.mxu0 %v1301
    %1868 = vmatprep.subr.bf16.mxu0 %v1300
    %1869 = vmatpush2.bf16.msra.mxu0 %v1299
    %1870 = vmatprep.subr.bf16.mxu0 %v1298
    %1871 = vmatpush2.bf16.msra.mxu0 %v1297
    %1872 = vmatprep.subr.bf16.mxu0 %v1296
    %1873 = vmatpush2.bf16.msra.mxu0 %v1295
    %1874 = vmatprep.subr.bf16.mxu0 %v1294
    %1875 = vmatpush2.bf16.msra.mxu0 %v1293
    %1876 = vmatprep.mubr.bf16.mxu0 %v76
    %1877 = vmatmul.mubr.bf16.gmra.mxu0 %v75
    %v1878 = vpop.f32.mrf.mxu0
    %v1879 = vadd.f32 %v1836, %v1878
    %v1880 = vpop.f32.mrf.mxu0
    %v1881 = vadd.f32 %v1838, %v1880
    %v1882 = vpop.f32.mrf.mxu0
    %v1883 = vadd.f32 %v1840, %v1882
    %v1884 = vpop.f32.mrf.mxu0
    %v1885 = vadd.f32 %v1842, %v1884
    %1886 = vdwg.mxu0
    %1887 = vmatprep.subr.bf16.mxu0 %v1324
    %1888 = vmatpush1.bf16.msra.mxu0 %v1323
    %1889 = vmatprep.subr.bf16.mxu0 %v1322
    %1890 = vmatpush1.bf16.msra.mxu0 %v1321
    %1891 = vmatprep.subr.bf16.mxu0 %v1320
    %1892 = vmatpush1.bf16.msra.mxu0 %v1319
    %1893 = vmatprep.subr.bf16.mxu0 %v1318
    %1894 = vmatpush1.bf16.msra.mxu0 %v1317
    %1895 = vmatprep.subr.bf16.mxu0 %v1316
    %1896 = vmatpush1.bf16.msra.mxu0 %v1315
    %1897 = vmatprep.subr.bf16.mxu0 %v1314
    %1898 = vmatpush1.bf16.msra.mxu0 %v1313
    %1899 = vmatprep.subr.bf16.mxu0 %v1312
    %1900 = vmatpush1.bf16.msra.mxu0 %v1311
    %1901 = vmatprep.subr.bf16.mxu0 %v1310
    %1902 = vmatpush1.bf16.msra.mxu0 %v1309
    %1903 = vmatprep.subr.bf16.mxu0 %v1340
    %1904 = vmatpush2.bf16.msra.mxu0 %v1339
    %1905 = vmatprep.subr.bf16.mxu0 %v1338
    %1906 = vmatpush2.bf16.msra.mxu0 %v1337
    %1907 = vmatprep.subr.bf16.mxu0 %v1336
    %1908 = vmatpush2.bf16.msra.mxu0 %v1335
    %1909 = vmatprep.subr.bf16.mxu0 %v1334
    %1910 = vmatpush2.bf16.msra.mxu0 %v1333
    %1911 = vmatprep.subr.bf16.mxu0 %v1332
    %1912 = vmatpush2.bf16.msra.mxu0 %v1331
    %1913 = vmatprep.subr.bf16.mxu0 %v1330
    %1914 = vmatpush2.bf16.msra.mxu0 %v1329
    %1915 = vmatprep.subr.bf16.mxu0 %v1328
    %1916 = vmatpush2.bf16.msra.mxu0 %v1327
    %1917 = vmatprep.subr.bf16.mxu0 %v1326
    %1918 = vmatpush2.bf16.msra.mxu0 %v1325
    %1919 = vmatprep.mubr.bf16.mxu0 %v78
    %1920 = vmatmul.mubr.bf16.gmra.mxu0 %v77
    %v1921 = vpop.f32.mrf.mxu0
    %v1922 = vadd.f32 %v1879, %v1921
    %v1923 = vpop.f32.mrf.mxu0
    %v1924 = vadd.f32 %v1881, %v1923
    %v1925 = vpop.f32.mrf.mxu0
    %v1926 = vadd.f32 %v1883, %v1925
    %v1927 = vpop.f32.mrf.mxu0
    %v1928 = vadd.f32 %v1885, %v1927
    %1929 = vdwg.mxu0
    %1930 = vmatprep.subr.bf16.mxu0 %v1356
    %1931 = vmatpush1.bf16.msra.mxu0 %v1355
    %1932 = vmatprep.subr.bf16.mxu0 %v1354
    %1933 = vmatpush1.bf16.msra.mxu0 %v1353
    %1934 = vmatprep.subr.bf16.mxu0 %v1352
    %1935 = vmatpush1.bf16.msra.mxu0 %v1351
    %1936 = vmatprep.subr.bf16.mxu0 %v1350
    %1937 = vmatpush1.bf16.msra.mxu0 %v1349
    %1938 = vmatprep.subr.bf16.mxu0 %v1348
    %1939 = vmatpush1.bf16.msra.mxu0 %v1347
    %1940 = vmatprep.subr.bf16.mxu0 %v1346
    %1941 = vmatpush1.bf16.msra.mxu0 %v1345
    %1942 = vmatprep.subr.bf16.mxu0 %v1344
    %1943 = vmatpush1.bf16.msra.mxu0 %v1343
    %1944 = vmatprep.subr.bf16.mxu0 %v1342
    %1945 = vmatpush1.bf16.msra.mxu0 %v1341
    %1946 = vmatprep.subr.bf16.mxu0 %v1372
    %1947 = vmatpush2.bf16.msra.mxu0 %v1371
    %1948 = vmatprep.subr.bf16.mxu0 %v1370
    %1949 = vmatpush2.bf16.msra.mxu0 %v1369
    %1950 = vmatprep.subr.bf16.mxu0 %v1368
    %1951 = vmatpush2.bf16.msra.mxu0 %v1367
    %1952 = vmatprep.subr.bf16.mxu0 %v1366
    %1953 = vmatpush2.bf16.msra.mxu0 %v1365
    %1954 = vmatprep.subr.bf16.mxu0 %v1364
    %1955 = vmatpush2.bf16.msra.mxu0 %v1363
    %1956 = vmatprep.subr.bf16.mxu0 %v1362
    %1957 = vmatpush2.bf16.msra.mxu0 %v1361
    %1958 = vmatprep.subr.bf16.mxu0 %v1360
    %1959 = vmatpush2.bf16.msra.mxu0 %v1359
    %1960 = vmatprep.subr.bf16.mxu0 %v1358
    %1961 = vmatpush2.bf16.msra.mxu0 %v1357
    %1962 = vmatprep.mubr.bf16.mxu0 %v80
    %1963 = vmatmul.mubr.bf16.gmra.mxu0 %v79
    %v1964 = vpop.f32.mrf.mxu0
    %v1965 = vadd.f32 %v1922, %v1964
    %v1966 = vpop.f32.mrf.mxu0
    %v1967 = vadd.f32 %v1924, %v1966
    %v1968 = vpop.f32.mrf.mxu0
    %v1969 = vadd.f32 %v1926, %v1968
    %v1970 = vpop.f32.mrf.mxu0
    %v1971 = vadd.f32 %v1928, %v1970
    %1972 = vdwg.mxu0
    %v1973 = vpack.c.bf16 %v1969, %v1965
    %v1974 = vpack.c.bf16 %v1971, %v1967
    %v1975 = vld [vmem:[%s2] sm:$0xff]
    %v1976 = vld [vmem:[%s2 + $0x8] sm:$0xff]
    %v1977 = vld [vmem:[%s2 + $0x10] sm:$0xff]
    %v1978 = vld [vmem:[%s2 + $0x18] sm:$0xff]
    %v1979 = vld [vmem:[%s2 + $0x20] sm:$0xff]
    %v1980 = vld [vmem:[%s2 + $0x28] sm:$0xff]
    %v1981 = vld [vmem:[%s2 + $0x30] sm:$0xff]
    %v1982 = vld [vmem:[%s2 + $0x38] sm:$0xff]
    %v1983 = vld [vmem:[%s2 + $0x40] sm:$0xff]
    %v1984 = vld [vmem:[%s2 + $0x48] sm:$0xff]
    %v1985 = vld [vmem:[%s2 + $0x50] sm:$0xff]
    %v1986 = vld [vmem:[%s2 + $0x58] sm:$0xff]
    %v1987 = vld [vmem:[%s2 + $0x60] sm:$0xff]
    %v1988 = vld [vmem:[%s2 + $0x68] sm:$0xff]
    %v1989 = vld [vmem:[%s2 + $0x70] sm:$0xff]
    %v1990 = vld [vmem:[%s2 + $0x78] sm:$0xff]
    %v1991 = vld [vmem:[%s2 + $0x80] sm:$0xff]
    %v1992 = vld [vmem:[%s2 + $0x88] sm:$0xff]
    %v1993 = vld [vmem:[%s2 + $0x90] sm:$0xff]
    %v1994 = vld [vmem:[%s2 + $0x98] sm:$0xff]
    %v1995 = vld [vmem:[%s2 + $0xa0] sm:$0xff]
    %v1996 = vld [vmem:[%s2 + $0xa8] sm:$0xff]
    %v1997 = vld [vmem:[%s2 + $0xb0] sm:$0xff]
    %v1998 = vld [vmem:[%s2 + $0xb8] sm:$0xff]
    %v1999 = vld [vmem:[%s2 + $0xc0] sm:$0xff]
    %v2000 = vld [vmem:[%s2 + $0xc8] sm:$0xff]
    %v2001 = vld [vmem:[%s2 + $0xd0] sm:$0xff]
    %v2002 = vld [vmem:[%s2 + $0xd8] sm:$0xff]
    %v2003 = vld [vmem:[%s2 + $0xe0] sm:$0xff]
    %v2004 = vld [vmem:[%s2 + $0xe8] sm:$0xff]
    %v2005 = vld [vmem:[%s2 + $0xf0] sm:$0xff]
    %v2006 = vld [vmem:[%s2 + $0xf8] sm:$0xff]
    %v2007 = vld [vmem:[%s2 + $0x100] sm:$0xff]
    %v2008 = vld [vmem:[%s2 + $0x108] sm:$0xff]
    %v2009 = vld [vmem:[%s2 + $0x110] sm:$0xff]
    %v2010 = vld [vmem:[%s2 + $0x118] sm:$0xff]
    %v2011 = vld [vmem:[%s2 + $0x120] sm:$0xff]
    %v2012 = vld [vmem:[%s2 + $0x128] sm:$0xff]
    %v2013 = vld [vmem:[%s2 + $0x130] sm:$0xff]
    %v2014 = vld [vmem:[%s2 + $0x138] sm:$0xff]
    %v2015 = vld [vmem:[%s2 + $0x140] sm:$0xff]
    %v2016 = vld [vmem:[%s2 + $0x148] sm:$0xff]
    %v2017 = vld [vmem:[%s2 + $0x150] sm:$0xff]
    %v2018 = vld [vmem:[%s2 + $0x158] sm:$0xff]
    %v2019 = vld [vmem:[%s2 + $0x160] sm:$0xff]
    %v2020 = vld [vmem:[%s2 + $0x168] sm:$0xff]
    %v2021 = vld [vmem:[%s2 + $0x170] sm:$0xff]
    %v2022 = vld [vmem:[%s2 + $0x178] sm:$0xff]
    %v2023 = vld [vmem:[%s2 + $0x180] sm:$0xff]
    %v2024 = vld [vmem:[%s2 + $0x188] sm:$0xff]
    %v2025 = vld [vmem:[%s2 + $0x190] sm:$0xff]
    %v2026 = vld [vmem:[%s2 + $0x198] sm:$0xff]
    %v2027 = vld [vmem:[%s2 + $0x1a0] sm:$0xff]
    %v2028 = vld [vmem:[%s2 + $0x1a8] sm:$0xff]
    %v2029 = vld [vmem:[%s2 + $0x1b0] sm:$0xff]
    %v2030 = vld [vmem:[%s2 + $0x1b8] sm:$0xff]
    %v2031 = vld [vmem:[%s2 + $0x1c0] sm:$0xff]
    %v2032 = vld [vmem:[%s2 + $0x1c8] sm:$0xff]
    %v2033 = vld [vmem:[%s2 + $0x1d0] sm:$0xff]
    %v2034 = vld [vmem:[%s2 + $0x1d8] sm:$0xff]
    %v2035 = vld [vmem:[%s2 + $0x1e0] sm:$0xff]
    %v2036 = vld [vmem:[%s2 + $0x1e8] sm:$0xff]
    %v2037 = vld [vmem:[%s2 + $0x1f0] sm:$0xff]
    %v2038 = vld [vmem:[%s2 + $0x1f8] sm:$0xff]
    %v2039 = vld [vmem:[%s7 + $0x2] sm:$0xf]
    %v2041 = vlaneseq
    %v2042 = vshrl.u32 %v2041, 7
    %v2043 = vsub.s32 0, %v2042
    %v2044 = vrot.slane %v2039, %v2043
    %v2045 = vlaneseq
    %v2046 = vshrl.u32 %v2045, 7
    %v2047 = vsub.s32 1, %v2046
    %v2048 = vrot.slane %v2039, %v2047
    %v2049 = vlaneseq
    %v2050 = vshrl.u32 %v2049, 7
    %v2051 = vsub.s32 2, %v2050
    %v2052 = vrot.slane %v2039, %v2051
    %v2053 = vlaneseq
    %v2054 = vshrl.u32 %v2053, 7
    %v2055 = vsub.s32 3, %v2054
    %v2056 = vrot.slane %v2039, %v2055
    %v2125 = vunpack.c.l.b16 %v1975
    %v2126 = vunpack.c.h.b16 %v1975
    %v2127 = vunpack.c.l.b16 %v1976
    %v2128 = vunpack.c.h.b16 %v1976
    %v2129 = vunpack.c.l.b16 %v1977
    %v2130 = vunpack.c.h.b16 %v1977
    %v2131 = vunpack.c.l.b16 %v1978
    %v2132 = vunpack.c.h.b16 %v1978
    %v2133 = vunpack.c.l.b16 %v1979
    %v2134 = vunpack.c.h.b16 %v1979
    %v2135 = vunpack.c.l.b16 %v1980
    %v2136 = vunpack.c.h.b16 %v1980
    %v2137 = vunpack.c.l.b16 %v1981
    %v2138 = vunpack.c.h.b16 %v1981
    %v2139 = vunpack.c.l.b16 %v1982
    %v2140 = vunpack.c.h.b16 %v1982
    %v2141 = vunpack.c.l.b16 %v1983
    %v2142 = vunpack.c.h.b16 %v1983
    %v2143 = vunpack.c.l.b16 %v1984
    %v2144 = vunpack.c.h.b16 %v1984
    %v2145 = vunpack.c.l.b16 %v1985
    %v2146 = vunpack.c.h.b16 %v1985
    %v2147 = vunpack.c.l.b16 %v1986
    %v2148 = vunpack.c.h.b16 %v1986
    %v2149 = vunpack.c.l.b16 %v1987
    %v2150 = vunpack.c.h.b16 %v1987
    %v2151 = vunpack.c.l.b16 %v1988
    %v2152 = vunpack.c.h.b16 %v1988
    %v2153 = vunpack.c.l.b16 %v1989
    %v2154 = vunpack.c.h.b16 %v1989
    %v2155 = vunpack.c.l.b16 %v1990
    %v2156 = vunpack.c.h.b16 %v1990
    %v2157 = vunpack.c.l.b16 %v1991
    %v2158 = vunpack.c.h.b16 %v1991
    %v2159 = vunpack.c.l.b16 %v1992
    %v2160 = vunpack.c.h.b16 %v1992
    %v2161 = vunpack.c.l.b16 %v1993
    %v2162 = vunpack.c.h.b16 %v1993
    %v2163 = vunpack.c.l.b16 %v1994
    %v2164 = vunpack.c.h.b16 %v1994
    %v2165 = vunpack.c.l.b16 %v1995
    %v2166 = vunpack.c.h.b16 %v1995
    %v2167 = vunpack.c.l.b16 %v1996
    %v2168 = vunpack.c.h.b16 %v1996
    %v2169 = vunpack.c.l.b16 %v1997
    %v2170 = vunpack.c.h.b16 %v1997
    %v2171 = vunpack.c.l.b16 %v1998
    %v2172 = vunpack.c.h.b16 %v1998
    %v2173 = vunpack.c.l.b16 %v1999
    %v2174 = vunpack.c.h.b16 %v1999
    %v2175 = vunpack.c.l.b16 %v2000
    %v2176 = vunpack.c.h.b16 %v2000
    %v2177 = vunpack.c.l.b16 %v2001
    %v2178 = vunpack.c.h.b16 %v2001
    %v2179 = vunpack.c.l.b16 %v2002
    %v2180 = vunpack.c.h.b16 %v2002
    %v2181 = vunpack.c.l.b16 %v2003
    %v2182 = vunpack.c.h.b16 %v2003
    %v2183 = vunpack.c.l.b16 %v2004
    %v2184 = vunpack.c.h.b16 %v2004
    %v2185 = vunpack.c.l.b16 %v2005
    %v2186 = vunpack.c.h.b16 %v2005
    %v2187 = vunpack.c.l.b16 %v2006
    %v2188 = vunpack.c.h.b16 %v2006
    %v2189 = vunpack.c.l.b16 %v2007
    %v2190 = vunpack.c.h.b16 %v2007
    %v2191 = vunpack.c.l.b16 %v2008
    %v2192 = vunpack.c.h.b16 %v2008
    %v2193 = vunpack.c.l.b16 %v2009
    %v2194 = vunpack.c.h.b16 %v2009
    %v2195 = vunpack.c.l.b16 %v2010
    %v2196 = vunpack.c.h.b16 %v2010
    %v2197 = vunpack.c.l.b16 %v2011
    %v2198 = vunpack.c.h.b16 %v2011
    %v2199 = vunpack.c.l.b16 %v2012
    %v2200 = vunpack.c.h.b16 %v2012
    %v2201 = vunpack.c.l.b16 %v2013
    %v2202 = vunpack.c.h.b16 %v2013
    %v2203 = vunpack.c.l.b16 %v2014
    %v2204 = vunpack.c.h.b16 %v2014
    %v2205 = vunpack.c.l.b16 %v2015
    %v2206 = vunpack.c.h.b16 %v2015
    %v2207 = vunpack.c.l.b16 %v2016
    %v2208 = vunpack.c.h.b16 %v2016
    %v2209 = vunpack.c.l.b16 %v2017
    %v2210 = vunpack.c.h.b16 %v2017
    %v2211 = vunpack.c.l.b16 %v2018
    %v2212 = vunpack.c.h.b16 %v2018
    %v2213 = vunpack.c.l.b16 %v2019
    %v2214 = vunpack.c.h.b16 %v2019
    %v2215 = vunpack.c.l.b16 %v2020
    %v2216 = vunpack.c.h.b16 %v2020
    %v2217 = vunpack.c.l.b16 %v2021
    %v2218 = vunpack.c.h.b16 %v2021
    %v2219 = vunpack.c.l.b16 %v2022
    %v2220 = vunpack.c.h.b16 %v2022
    %v2221 = vunpack.c.l.b16 %v2023
    %v2222 = vunpack.c.h.b16 %v2023
    %v2223 = vunpack.c.l.b16 %v2024
    %v2224 = vunpack.c.h.b16 %v2024
    %v2225 = vunpack.c.l.b16 %v2025
    %v2226 = vunpack.c.h.b16 %v2025
    %v2227 = vunpack.c.l.b16 %v2026
    %v2228 = vunpack.c.h.b16 %v2026
    %v2229 = vunpack.c.l.b16 %v2027
    %v2230 = vunpack.c.h.b16 %v2027
    %v2231 = vunpack.c.l.b16 %v2028
    %v2232 = vunpack.c.h.b16 %v2028
    %v2233 = vunpack.c.l.b16 %v2029
    %v2234 = vunpack.c.h.b16 %v2029
    %v2235 = vunpack.c.l.b16 %v2030
    %v2236 = vunpack.c.h.b16 %v2030
    %v2237 = vunpack.c.l.b16 %v2031
    %v2238 = vunpack.c.h.b16 %v2031
    %v2239 = vunpack.c.l.b16 %v2032
    %v2240 = vunpack.c.h.b16 %v2032
    %v2241 = vunpack.c.l.b16 %v2033
    %v2242 = vunpack.c.h.b16 %v2033
    %v2243 = vunpack.c.l.b16 %v2034
    %v2244 = vunpack.c.h.b16 %v2034
    %v2245 = vunpack.c.l.b16 %v2035
    %v2246 = vunpack.c.h.b16 %v2035
    %v2247 = vunpack.c.l.b16 %v2036
    %v2248 = vunpack.c.h.b16 %v2036
    %v2249 = vunpack.c.l.b16 %v2037
    %v2250 = vunpack.c.h.b16 %v2037
    %v2251 = vunpack.c.l.b16 %v2038
    %v2252 = vunpack.c.h.b16 %v2038
    %v2253 = vpack.c.b16 %v2129, %v2125
    %v2254 = vpack.c.b16 %v2130, %v2126
    %v2255 = vpack.c.b16 %v2131, %v2127
    %v2256 = vpack.c.b16 %v2132, %v2128
    %v2257 = vpack.c.b16 %v2137, %v2133
    %v2258 = vpack.c.b16 %v2138, %v2134
    %v2259 = vpack.c.b16 %v2139, %v2135
    %v2260 = vpack.c.b16 %v2140, %v2136
    %v2261 = vpack.c.b16 %v2145, %v2141
    %v2262 = vpack.c.b16 %v2146, %v2142
    %v2263 = vpack.c.b16 %v2147, %v2143
    %v2264 = vpack.c.b16 %v2148, %v2144
    %v2265 = vpack.c.b16 %v2153, %v2149
    %v2266 = vpack.c.b16 %v2154, %v2150
    %v2267 = vpack.c.b16 %v2155, %v2151
    %v2268 = vpack.c.b16 %v2156, %v2152
    %v2269 = vpack.c.b16 %v2161, %v2157
    %v2270 = vpack.c.b16 %v2162, %v2158
    %v2271 = vpack.c.b16 %v2163, %v2159
    %v2272 = vpack.c.b16 %v2164, %v2160
    %v2273 = vpack.c.b16 %v2169, %v2165
    %v2274 = vpack.c.b16 %v2170, %v2166
    %v2275 = vpack.c.b16 %v2171, %v2167
    %v2276 = vpack.c.b16 %v2172, %v2168
    %v2277 = vpack.c.b16 %v2177, %v2173
    %v2278 = vpack.c.b16 %v2178, %v2174
    %v2279 = vpack.c.b16 %v2179, %v2175
    %v2280 = vpack.c.b16 %v2180, %v2176
    %v2281 = vpack.c.b16 %v2185, %v2181
    %v2282 = vpack.c.b16 %v2186, %v2182
    %v2283 = vpack.c.b16 %v2187, %v2183
    %v2284 = vpack.c.b16 %v2188, %v2184
    %v2285 = vpack.c.b16 %v2193, %v2189
    %v2286 = vpack.c.b16 %v2194, %v2190
    %v2287 = vpack.c.b16 %v2195, %v2191
    %v2288 = vpack.c.b16 %v2196, %v2192
    %v2289 = vpack.c.b16 %v2201, %v2197
    %v2290 = vpack.c.b16 %v2202, %v2198
    %v2291 = vpack.c.b16 %v2203, %v2199
    %v2292 = vpack.c.b16 %v2204, %v2200
    %v2293 = vpack.c.b16 %v2209, %v2205
    %v2294 = vpack.c.b16 %v2210, %v2206
    %v2295 = vpack.c.b16 %v2211, %v2207
    %v2296 = vpack.c.b16 %v2212, %v2208
    %v2297 = vpack.c.b16 %v2217, %v2213
    %v2298 = vpack.c.b16 %v2218, %v2214
    %v2299 = vpack.c.b16 %v2219, %v2215
    %v2300 = vpack.c.b16 %v2220, %v2216
    %v2301 = vpack.c.b16 %v2225, %v2221
    %v2302 = vpack.c.b16 %v2226, %v2222
    %v2303 = vpack.c.b16 %v2227, %v2223
    %v2304 = vpack.c.b16 %v2228, %v2224
    %v2305 = vpack.c.b16 %v2233, %v2229
    %v2306 = vpack.c.b16 %v2234, %v2230
    %v2307 = vpack.c.b16 %v2235, %v2231
    %v2308 = vpack.c.b16 %v2236, %v2232
    %v2309 = vpack.c.b16 %v2241, %v2237
    %v2310 = vpack.c.b16 %v2242, %v2238
    %v2311 = vpack.c.b16 %v2243, %v2239
    %v2312 = vpack.c.b16 %v2244, %v2240
    %v2313 = vpack.c.b16 %v2249, %v2245
    %v2314 = vpack.c.b16 %v2250, %v2246
    %v2315 = vpack.c.b16 %v2251, %v2247
    %v2316 = vpack.c.b16 %v2252, %v2248
    %2381 = vmatprep.subr.bf16.mxu0 %v2282
    %2382 = vmatpush1.bf16.msra.mxu0 %v2281
    %2383 = vmatprep.subr.bf16.mxu0 %v2278
    %2384 = vmatpush1.bf16.msra.mxu0 %v2277
    %2385 = vmatprep.subr.bf16.mxu0 %v2274
    %2386 = vmatpush1.bf16.msra.mxu0 %v2273
    %2387 = vmatprep.subr.bf16.mxu0 %v2270
    %2388 = vmatpush1.bf16.msra.mxu0 %v2269
    %2389 = vmatprep.subr.bf16.mxu0 %v2266
    %2390 = vmatpush1.bf16.msra.mxu0 %v2265
    %2391 = vmatprep.subr.bf16.mxu0 %v2262
    %2392 = vmatpush1.bf16.msra.mxu0 %v2261
    %2393 = vmatprep.subr.bf16.mxu0 %v2258
    %2394 = vmatpush1.bf16.msra.mxu0 %v2257
    %2395 = vmatprep.subr.bf16.mxu0 %v2254
    %2396 = vmatpush1.bf16.msra.mxu0 %v2253
    %2397 = vmatprep.subr.bf16.mxu0 %v2314
    %2398 = vmatpush2.bf16.msra.mxu0 %v2313
    %2399 = vmatprep.subr.bf16.mxu0 %v2310
    %2400 = vmatpush2.bf16.msra.mxu0 %v2309
    %2401 = vmatprep.subr.bf16.mxu0 %v2306
    %2402 = vmatpush2.bf16.msra.mxu0 %v2305
    %2403 = vmatprep.subr.bf16.mxu0 %v2302
    %2404 = vmatpush2.bf16.msra.mxu0 %v2301
    %2405 = vmatprep.subr.bf16.mxu0 %v2298
    %2406 = vmatpush2.bf16.msra.mxu0 %v2297
    %2407 = vmatprep.subr.bf16.mxu0 %v2294
    %2408 = vmatpush2.bf16.msra.mxu0 %v2293
    %2409 = vmatprep.subr.bf16.mxu0 %v2290
    %2410 = vmatpush2.bf16.msra.mxu0 %v2289
    %2411 = vmatprep.subr.bf16.mxu0 %v2286
    %2412 = vmatpush2.bf16.msra.mxu0 %v2285
    %2413 = vmatprep.mubr.bf16.mxu0 %v1974
    %2414 = vmatmul.mubr.bf16.gmra.mxu0 %v1973
    %v2415 = vpop.f32.mrf.mxu0
    %v2416 = vadd.f32 %v2044, %v2415
    %v2417 = vpop.f32.mrf.mxu0
    %v2418 = vadd.f32 %v2048, %v2417
    %v2419 = vpop.f32.mrf.mxu0
    %v2420 = vadd.f32 %v2044, %v2419
    %v2421 = vpop.f32.mrf.mxu0
    %v2422 = vadd.f32 %v2048, %v2421
    %2423 = vdwg.mxu0
    %2424 = vmatprep.subr.bf16.mxu0 %v2284
    %2425 = vmatpush1.bf16.msra.mxu0 %v2283
    %2426 = vmatprep.subr.bf16.mxu0 %v2280
    %2427 = vmatpush1.bf16.msra.mxu0 %v2279
    %2428 = vmatprep.subr.bf16.mxu0 %v2276
    %2429 = vmatpush1.bf16.msra.mxu0 %v2275
    %2430 = vmatprep.subr.bf16.mxu0 %v2272
    %2431 = vmatpush1.bf16.msra.mxu0 %v2271
    %2432 = vmatprep.subr.bf16.mxu0 %v2268
    %2433 = vmatpush1.bf16.msra.mxu0 %v2267
    %2434 = vmatprep.subr.bf16.mxu0 %v2264
    %2435 = vmatpush1.bf16.msra.mxu0 %v2263
    %2436 = vmatprep.subr.bf16.mxu0 %v2260
    %2437 = vmatpush1.bf16.msra.mxu0 %v2259
    %2438 = vmatprep.subr.bf16.mxu0 %v2256
    %2439 = vmatpush1.bf16.msra.mxu0 %v2255
    %2440 = vmatprep.subr.bf16.mxu0 %v2316
    %2441 = vmatpush2.bf16.msra.mxu0 %v2315
    %2442 = vmatprep.subr.bf16.mxu0 %v2312
    %2443 = vmatpush2.bf16.msra.mxu0 %v2311
    %2444 = vmatprep.subr.bf16.mxu0 %v2308
    %2445 = vmatpush2.bf16.msra.mxu0 %v2307
    %2446 = vmatprep.subr.bf16.mxu0 %v2304
    %2447 = vmatpush2.bf16.msra.mxu0 %v2303
    %2448 = vmatprep.subr.bf16.mxu0 %v2300
    %2449 = vmatpush2.bf16.msra.mxu0 %v2299
    %2450 = vmatprep.subr.bf16.mxu0 %v2296
    %2451 = vmatpush2.bf16.msra.mxu0 %v2295
    %2452 = vmatprep.subr.bf16.mxu0 %v2292
    %2453 = vmatpush2.bf16.msra.mxu0 %v2291
    %2454 = vmatprep.subr.bf16.mxu0 %v2288
    %2455 = vmatpush2.bf16.msra.mxu0 %v2287
    %2456 = vmatprep.mubr.bf16.mxu0 %v1974
    %2457 = vmatmul.mubr.bf16.gmra.mxu0 %v1973
    %v2458 = vpop.f32.mrf.mxu0
    %v2459 = vadd.f32 %v2052, %v2458
    %v2460 = vpop.f32.mrf.mxu0
    %v2461 = vadd.f32 %v2056, %v2460
    %v2462 = vpop.f32.mrf.mxu0
    %v2463 = vadd.f32 %v2052, %v2462
    %v2464 = vpop.f32.mrf.mxu0
    %v2465 = vadd.f32 %v2056, %v2464
    %2466 = vdwg.mxu0
    %v2467 = vtanh.pop %v2416
    %v2468 = vtanh.pop %v2418
    %v2469 = vtanh.pop %v2420
    %v2470 = vtanh.pop %v2422
    %v2471 = vxor.u32 %v2459, 2147483648
    %v2472 = vxor.u32 %v2461, 2147483648
    %v2473 = vxor.u32 %v2463, 2147483648
    %v2474 = vxor.u32 %v2465, 2147483648
    %v2475 = vmul.f32 %v2471, 1.442695
    %v2476 = vpow.pop %v2475
    %v2477 = vmul.f32 %v2472, 1.442695
    %v2478 = vpow.pop %v2477
    %v2479 = vmul.f32 %v2473, 1.442695
    %v2480 = vpow.pop %v2479
    %v2481 = vmul.f32 %v2474, 1.442695
    %v2482 = vpow.pop %v2481
    %v2483 = vadd.f32 %v2476, 1.0
    %v2484 = vadd.f32 %v2478, 1.0
    %v2485 = vadd.f32 %v2480, 1.0
    %v2486 = vadd.f32 %v2482, 1.0
    %v2487 = vrcp.pop %v2483
    %v2488 = vmul.f32 1.0, %v2487
    %v2489 = vrcp.pop %v2484
    %v2490 = vmul.f32 1.0, %v2489
    %v2491 = vrcp.pop %v2485
    %v2492 = vmul.f32 1.0, %v2491
    %v2493 = vrcp.pop %v2486
    %v2494 = vmul.f32 1.0, %v2493
    %v2495 = vmul.f32 %v2467, %v2488
    %v2496 = vmul.f32 %v2468, %v2490
    %v2497 = vmul.f32 %v2469, %v2492
    %v2498 = vmul.f32 %v2470, %v2494
    %v2499 = vld [vmem:[%s7 + $0x6] sm:$0x3]
    %v2501 = vlaneseq
    %v2502 = vshrl.u32 %v2501, 7
    %v2503 = vsub.s32 0, %v2502
    %v2504 = vrot.slane %v2499, %v2503
    %v2505 = vlaneseq
    %v2506 = vshrl.u32 %v2505, 7
    %v2507 = vsub.s32 1, %v2506
    %v2508 = vrot.slane %v2499, %v2507
    %v2511 = vmul.f32 %v2495, %v2504
    %v2512 = vmul.f32 %v2496, %v2508
    %v2513 = vmul.f32 %v2497, %v2504
    %v2514 = vmul.f32 %v2498, %v2508
    %v2515 = vadd.f32 %v2511, %v2512
    %2516 = vadd.xlane.f32.xlu0 %v2515
    %v2517 = vpop.xlane.xlu0 %2516
    %v2518 = vadd.f32 %v2513, %v2514
    %2519 = vadd.xlane.f32.xlu0 %v2518
    %v2520 = vpop.xlane.xlu0 %2519
    %v2521 = vld [vmem:[%s7 + $0x8] sm:$0x1]
    %v2523 = vlaneseq
    %v2524 = vshrl.u32 %v2523, 7
    %v2525 = vsub.s32 0, %v2524
    %v2526 = vrot.slane %v2521, %v2525
    %2527 = vset.pattern.permute.xlu0 0
    %2528 = vperm.xlu0 %2527, %v2526
    %v2529 = vpop.permute.xlu0 %2528
    %v2531 = vadd.f32 %v2517, %v2529
    %v2532 = vadd.f32 %v2520, %v2529
    %v2535 = vlaneseq
    %v2536 = vand.u32 %v2535, 127
    %v2537 = vlaneseq
    %v2538 = vshrl.u32 %v2537, 7
    %v2539 = vsub.s32 %v2536, %v2538
    %v2540 = vrot.slane %v2531, %v2539
    %v2541 = vlaneseq
    %v2542 = vshrl.u32 %v2541, 7
    %v2543 = vsub.s32 %v2536, %v2542
    %v2544 = vrot.slane %v2532, %v2543
    %vm2545 = vcmask 1041409
    %v2546 = vsel %vm2545, %v2544, %v2540
    %vm2548 = vcmask 58368
    %v2549 = vsel %vm2548, %v2546, -inf
    %2550 = vmax.xlane.f32.xlu0 %v2549
    %v2551 = vpop.xlane.xlu0 %2550
    %v2553 = vlaneseq
    %v2554 = vshrl.u32 %v2553, 7
    %v2555 = vsub.s32 0, %v2554
    %v2556 = vrot.slane %v2551, %v2555
    %v2557 = vlaneseq
    %v2558 = vshrl.u32 %v2557, 7
    %v2559 = vsub.s32 1, %v2558
    %v2560 = vrot.slane %v2551, %v2559
    %v2563 = vsub.f32 %v2531, %v2556
    %v2564 = vsub.f32 %v2532, %v2560
    %v2565 = vmul.f32 %v2563, 1.442695
    %v2566 = vpow.pop %v2565
    %v2567 = vmul.f32 %v2564, 1.442695
    %v2568 = vpow.pop %v2567
    %2571 = vset.pattern.permute.xlu0 0
    %2572 = vperm.xlu0 %2571, %v2566
    %v2573 = vpop.permute.xlu0 %2572
    %2574 = vset.pattern.permute.xlu0 0
    %2575 = vperm.xlu0 %2574, %v2568
    %v2576 = vpop.permute.xlu0 %2575
    %v2577 = vlaneseq
    %v2578 = vshrl.u32 %v2577, 7
    %v2579 = vsub.s32 %v2536, %v2578
    %v2580 = vrot.slane %v2573, %v2579
    %v2581 = vlaneseq
    %v2582 = vshrl.u32 %v2581, 7
    %v2583 = vsub.s32 %v2536, %v2582
    %v2584 = vrot.slane %v2576, %v2583
    %v2585 = vsel %vm2545, %v2584, %v2580
    %v2587 = vsel %vm2548, %v2585, 0.0
    %2588 = vadd.xlane.f32.xlu0 %v2587
    %v2589 = vpop.xlane.xlu0 %2588
    %v2591 = vlaneseq
    %v2592 = vshrl.u32 %v2591, 7
    %v2593 = vsub.s32 0, %v2592
    %v2594 = vrot.slane %v2589, %v2593
    %v2595 = vlaneseq
    %v2596 = vshrl.u32 %v2595, 7
    %v2597 = vsub.s32 1, %v2596
    %v2598 = vrot.slane %v2589, %v2597
    %v2601 = vrcp.pop %v2594
    %v2602 = vmul.f32 %v2566, %v2601
    %v2603 = vrcp.pop %v2598
    %v2604 = vmul.f32 %v2568, %v2603
    %2606 = vset.pattern.permute.xlu0 0
    %2607 = vperm.xlu0 %2606, %v2602
    %v2608 = vpop.permute.xlu0 %2607
    %2611 = vset.pattern.permute.xlu0 0
    %2612 = vperm.xlu0 %2611, %v2604
    %v2613 = vpop.permute.xlu0 %2612
    %v2615 = vmul.f32 %v2608, %v1965
    %v2616 = vmul.f32 %v2608, %v1967
    %v2617 = vmul.f32 %v2613, %v1969
    %v2618 = vmul.f32 %v2613, %v1971
    %v2619 = vrot.slane %v2615, 4
    %v2620 = vadd.f32 %v2615, %v2619
    %v2621 = vrot.slane %v2620, 2
    %v2622 = vadd.f32 %v2620, %v2621
    %v2623 = vrot.slane %v2622, 1
    %v2624 = vadd.f32 %v2622, %v2623
    %v2625 = vrot.slane %v2616, 4
    %v2626 = vadd.f32 %v2616, %v2625
    %v2627 = vrot.slane %v2626, 2
    %v2628 = vadd.f32 %v2626, %v2627
    %v2629 = vrot.slane %v2628, 1
    %v2630 = vadd.f32 %v2628, %v2629
    %v2631 = vrot.slane %v2617, 4
    %v2632 = vadd.f32 %v2617, %v2631
    %v2633 = vrot.slane %v2632, 2
    %v2634 = vadd.f32 %v2632, %v2633
    %v2635 = vrot.slane %v2634, 1
    %v2636 = vadd.f32 %v2634, %v2635
    %v2637 = vrot.slane %v2618, 4
    %v2638 = vadd.f32 %v2618, %v2637
    %v2639 = vrot.slane %v2638, 2
    %v2640 = vadd.f32 %v2638, %v2639
    %v2641 = vrot.slane %v2640, 1
    %v2642 = vadd.f32 %v2640, %v2641
    %v2643 = vpack.c.bf16 %v2624, %v2624
    %v2644 = vpack.c.bf16 %v2630, %v2630
    %v2645 = vpack.c.bf16 %v2636, %v2636
    %v2646 = vpack.c.bf16 %v2642, %v2642
    %v2647 = vld [vmem:[%s3] sm:$0xf]
    %v2648 = vld [vmem:[%s3 + $0x4] sm:$0xf]
    %v2649 = vld [vmem:[%s3 + $0x8] sm:$0xf]
    %v2650 = vld [vmem:[%s3 + $0xc] sm:$0xf]
    %v2651 = vld [vmem:[%s3 + $0x10] sm:$0xf]
    %v2652 = vld [vmem:[%s3 + $0x14] sm:$0xf]
    %v2653 = vld [vmem:[%s3 + $0x18] sm:$0xf]
    %v2654 = vld [vmem:[%s3 + $0x1c] sm:$0xf]
    %v2655 = vld [vmem:[%s3 + $0x20] sm:$0xf]
    %v2656 = vld [vmem:[%s3 + $0x24] sm:$0xf]
    %v2657 = vld [vmem:[%s3 + $0x28] sm:$0xf]
    %v2658 = vld [vmem:[%s3 + $0x2c] sm:$0xf]
    %v2659 = vld [vmem:[%s3 + $0x30] sm:$0xf]
    %v2660 = vld [vmem:[%s3 + $0x34] sm:$0xf]
    %v2661 = vld [vmem:[%s3 + $0x38] sm:$0xf]
    %v2662 = vld [vmem:[%s3 + $0x3c] sm:$0xf]
    %v2663 = vld [vmem:[%s3 + $0x40] sm:$0xf]
    %v2664 = vld [vmem:[%s3 + $0x44] sm:$0xf]
    %v2665 = vld [vmem:[%s3 + $0x48] sm:$0xf]
    %v2666 = vld [vmem:[%s3 + $0x4c] sm:$0xf]
    %v2667 = vld [vmem:[%s3 + $0x50] sm:$0xf]
    %v2668 = vld [vmem:[%s3 + $0x54] sm:$0xf]
    %v2669 = vld [vmem:[%s3 + $0x58] sm:$0xf]
    %v2670 = vld [vmem:[%s3 + $0x5c] sm:$0xf]
    %v2671 = vld [vmem:[%s3 + $0x60] sm:$0xf]
    %v2672 = vld [vmem:[%s3 + $0x64] sm:$0xf]
    %v2673 = vld [vmem:[%s3 + $0x68] sm:$0xf]
    %v2674 = vld [vmem:[%s3 + $0x6c] sm:$0xf]
    %v2675 = vld [vmem:[%s3 + $0x70] sm:$0xf]
    %v2676 = vld [vmem:[%s3 + $0x74] sm:$0xf]
    %v2677 = vld [vmem:[%s3 + $0x78] sm:$0xf]
    %v2678 = vld [vmem:[%s3 + $0x7c] sm:$0xf]
    %v2679 = vld [vmem:[%s7 + $0x9] sm:$0x1]
    %v2681 = vlaneseq
    %v2682 = vshrl.u32 %v2681, 7
    %v2683 = vsub.s32 0, %v2682
    %v2684 = vrot.slane %v2679, %v2683
    %v2690 = vunpack.c.l.b16 %v2643
    %v2691 = vunpack.c.l.b16 %v2644
    %v2692 = vunpack.c.l.b16 %v2645
    %v2693 = vunpack.c.l.b16 %v2646
    %v2694 = vsel %vm2545, %v2692, %v2690
    %v2695 = vsel %vm2545, %v2693, %v2691
    %v2696 = vpack.c.b16 %v2694, %v2694
    %v2697 = vpack.c.b16 %v2695, %v2695
    %v2732 = vunpack.c.l.b16 %v2647
    %v2733 = vunpack.c.l.b16 %v2648
    %v2734 = vunpack.c.l.b16 %v2649
    %v2735 = vunpack.c.l.b16 %v2650
    %v2736 = vunpack.c.l.b16 %v2651
    %v2737 = vunpack.c.l.b16 %v2652
    %v2738 = vunpack.c.l.b16 %v2653
    %v2739 = vunpack.c.l.b16 %v2654
    %v2740 = vunpack.c.l.b16 %v2655
    %v2741 = vunpack.c.l.b16 %v2656
    %v2742 = vunpack.c.l.b16 %v2657
    %v2743 = vunpack.c.l.b16 %v2658
    %v2744 = vunpack.c.l.b16 %v2659
    %v2745 = vunpack.c.l.b16 %v2660
    %v2746 = vunpack.c.l.b16 %v2661
    %v2747 = vunpack.c.l.b16 %v2662
    %v2748 = vunpack.c.l.b16 %v2663
    %v2749 = vunpack.c.l.b16 %v2664
    %v2750 = vunpack.c.l.b16 %v2665
    %v2751 = vunpack.c.l.b16 %v2666
    %v2752 = vunpack.c.l.b16 %v2667
    %v2753 = vunpack.c.l.b16 %v2668
    %v2754 = vunpack.c.l.b16 %v2669
    %v2755 = vunpack.c.l.b16 %v2670
    %v2756 = vunpack.c.l.b16 %v2671
    %v2757 = vunpack.c.l.b16 %v2672
    %v2758 = vunpack.c.l.b16 %v2673
    %v2759 = vunpack.c.l.b16 %v2674
    %v2760 = vunpack.c.l.b16 %v2675
    %v2761 = vunpack.c.l.b16 %v2676
    %v2762 = vunpack.c.l.b16 %v2677
    %v2763 = vunpack.c.l.b16 %v2678
    %v2764 = vpack.c.b16 %v2733, %v2732
    %v2765 = vpack.c.b16 %v2735, %v2734
    %v2766 = vpack.c.b16 %v2737, %v2736
    %v2767 = vpack.c.b16 %v2739, %v2738
    %v2768 = vpack.c.b16 %v2741, %v2740
    %v2769 = vpack.c.b16 %v2743, %v2742
    %v2770 = vpack.c.b16 %v2745, %v2744
    %v2771 = vpack.c.b16 %v2747, %v2746
    %v2772 = vpack.c.b16 %v2749, %v2748
    %v2773 = vpack.c.b16 %v2751, %v2750
    %v2774 = vpack.c.b16 %v2753, %v2752
    %v2775 = vpack.c.b16 %v2755, %v2754
    %v2776 = vpack.c.b16 %v2757, %v2756
    %v2777 = vpack.c.b16 %v2759, %v2758
    %v2778 = vpack.c.b16 %v2761, %v2760
    %v2779 = vpack.c.b16 %v2763, %v2762
    %2796 = vmatprep.subr.bf16.mxu0 0
    %2797 = vmatpush1.bf16.msra.mxu0 %v2771
    %2798 = vmatprep.subr.bf16.mxu0 0
    %2799 = vmatpush1.bf16.msra.mxu0 %v2770
    %2800 = vmatprep.subr.bf16.mxu0 0
    %2801 = vmatpush1.bf16.msra.mxu0 %v2769
    %2802 = vmatprep.subr.bf16.mxu0 0
    %2803 = vmatpush1.bf16.msra.mxu0 %v2768
    %2804 = vmatprep.subr.bf16.mxu0 0
    %2805 = vmatpush1.bf16.msra.mxu0 %v2767
    %2806 = vmatprep.subr.bf16.mxu0 0
    %2807 = vmatpush1.bf16.msra.mxu0 %v2766
    %2808 = vmatprep.subr.bf16.mxu0 0
    %2809 = vmatpush1.bf16.msra.mxu0 %v2765
    %2810 = vmatprep.subr.bf16.mxu0 0
    %2811 = vmatpush1.bf16.msra.mxu0 %v2764
    %2812 = vmatprep.subr.bf16.mxu0 0
    %2813 = vmatpush2.bf16.msra.mxu0 %v2779
    %2814 = vmatprep.subr.bf16.mxu0 0
    %2815 = vmatpush2.bf16.msra.mxu0 %v2778
    %2816 = vmatprep.subr.bf16.mxu0 0
    %2817 = vmatpush2.bf16.msra.mxu0 %v2777
    %2818 = vmatprep.subr.bf16.mxu0 0
    %2819 = vmatpush2.bf16.msra.mxu0 %v2776
    %2820 = vmatprep.subr.bf16.mxu0 0
    %2821 = vmatpush2.bf16.msra.mxu0 %v2775
    %2822 = vmatprep.subr.bf16.mxu0 0
    %2823 = vmatpush2.bf16.msra.mxu0 %v2774
    %2824 = vmatprep.subr.bf16.mxu0 0
    %2825 = vmatpush2.bf16.msra.mxu0 %v2773
    %2826 = vmatprep.subr.bf16.mxu0 0
    %2827 = vmatpush2.bf16.msra.mxu0 %v2772
    %2828 = vmatprep.mubr.bf16.mxu0 %v2697
    %2829 = vmatmul.mubr.bf16.gmra.mxu0 %v2696
    %v2830 = vpop.f32.mrf.mxu0
    %v2831 = vadd.f32 %v2684, %v2830
    %v2832 = vpop.f32.mrf.mxu0
    %v2833 = vpop.f32.mrf.mxu0
    %v2834 = vpop.f32.mrf.mxu0
    %2835 = vdwg.mxu0
    %v2836 = vtanh.pop %v2831
    %v2837 = vpack.c.bf16 %v2836, %v2836
    %v2838 = vld [vmem:[%s4] sm:$0xf]
    %v2839 = vld [vmem:[%s4 + $0x4] sm:$0xf]
    %v2840 = vld [vmem:[%s4 + $0x8] sm:$0xf]
    %v2841 = vld [vmem:[%s4 + $0xc] sm:$0xf]
    %v2842 = vld [vmem:[%s4 + $0x10] sm:$0xf]
    %v2843 = vld [vmem:[%s4 + $0x14] sm:$0xf]
    %v2844 = vld [vmem:[%s4 + $0x18] sm:$0xf]
    %v2845 = vld [vmem:[%s4 + $0x1c] sm:$0xf]
    %v2846 = vld [vmem:[%s4 + $0x20] sm:$0xf]
    %v2847 = vld [vmem:[%s4 + $0x24] sm:$0xf]
    %v2848 = vld [vmem:[%s4 + $0x28] sm:$0xf]
    %v2849 = vld [vmem:[%s4 + $0x2c] sm:$0xf]
    %v2850 = vld [vmem:[%s4 + $0x30] sm:$0xf]
    %v2851 = vld [vmem:[%s4 + $0x34] sm:$0xf]
    %v2852 = vld [vmem:[%s4 + $0x38] sm:$0xf]
    %v2853 = vld [vmem:[%s4 + $0x3c] sm:$0xf]
    %v2854 = vld [vmem:[%s7 + $0xa] sm:$0x1]
    %v2856 = vlaneseq
    %v2857 = vshrl.u32 %v2856, 7
    %v2858 = vsub.s32 0, %v2857
    %v2859 = vrot.slane %v2854, %v2858
    %v2877 = vunpack.c.l.b16 %v2838
    %v2878 = vunpack.c.l.b16 %v2839
    %v2879 = vunpack.c.l.b16 %v2840
    %v2880 = vunpack.c.l.b16 %v2841
    %v2881 = vunpack.c.l.b16 %v2842
    %v2882 = vunpack.c.l.b16 %v2843
    %v2883 = vunpack.c.l.b16 %v2844
    %v2884 = vunpack.c.l.b16 %v2845
    %v2885 = vunpack.c.l.b16 %v2846
    %v2886 = vunpack.c.l.b16 %v2847
    %v2887 = vunpack.c.l.b16 %v2848
    %v2888 = vunpack.c.l.b16 %v2849
    %v2889 = vunpack.c.l.b16 %v2850
    %v2890 = vunpack.c.l.b16 %v2851
    %v2891 = vunpack.c.l.b16 %v2852
    %v2892 = vunpack.c.l.b16 %v2853
    %v2893 = vpack.c.b16 %v2878, %v2877
    %v2894 = vpack.c.b16 %v2880, %v2879
    %v2895 = vpack.c.b16 %v2882, %v2881
    %v2896 = vpack.c.b16 %v2884, %v2883
    %v2897 = vpack.c.b16 %v2886, %v2885
    %v2898 = vpack.c.b16 %v2888, %v2887
    %v2899 = vpack.c.b16 %v2890, %v2889
    %v2900 = vpack.c.b16 %v2892, %v2891
    %2909 = vmatprep.subr.bf16.mxu0 0
    %2910 = vmatpush1.bf16.msra.mxu0 %v2900
    %2911 = vmatprep.subr.bf16.mxu0 0
    %2912 = vmatpush1.bf16.msra.mxu0 %v2899
    %2913 = vmatprep.subr.bf16.mxu0 0
    %2914 = vmatpush1.bf16.msra.mxu0 %v2898
    %2915 = vmatprep.subr.bf16.mxu0 0
    %2916 = vmatpush1.bf16.msra.mxu0 %v2897
    %2917 = vmatprep.subr.bf16.mxu0 0
    %2918 = vmatpush1.bf16.msra.mxu0 %v2896
    %2919 = vmatprep.subr.bf16.mxu0 0
    %2920 = vmatpush1.bf16.msra.mxu0 %v2895
    %2921 = vmatprep.subr.bf16.mxu0 0
    %2922 = vmatpush1.bf16.msra.mxu0 %v2894
    %2923 = vmatprep.subr.bf16.mxu0 0
    %2924 = vmatpush1.bf16.msra.mxu0 %v2893
    %2925 = vmatprep.subr.bf16.mxu0 0
    %2926 = vmatpush2.bf16.msra.mxu0 0
    %2927 = vmatprep.subr.bf16.mxu0 0
    %2928 = vmatpush2.bf16.msra.mxu0 0
    %2929 = vmatprep.subr.bf16.mxu0 0
    %2930 = vmatpush2.bf16.msra.mxu0 0
    %2931 = vmatprep.subr.bf16.mxu0 0
    %2932 = vmatpush2.bf16.msra.mxu0 0
    %2933 = vmatprep.subr.bf16.mxu0 0
    %2934 = vmatpush2.bf16.msra.mxu0 0
    %2935 = vmatprep.subr.bf16.mxu0 0
    %2936 = vmatpush2.bf16.msra.mxu0 0
    %2937 = vmatprep.subr.bf16.mxu0 0
    %2938 = vmatpush2.bf16.msra.mxu0 0
    %2939 = vmatprep.subr.bf16.mxu0 0
    %2940 = vmatpush2.bf16.msra.mxu0 0
    %2941 = vmatprep.mubr.bf16.mxu0 0
    %2942 = vmatmul.mubr.bf16.gmra.mxu0 %v2837
    %v2943 = vpop.f32.mrf.mxu0
    %v2944 = vadd.f32 %v2859, %v2943
    %v2945 = vpop.f32.mrf.mxu0
    %v2946 = vpop.f32.mrf.mxu0
    %v2947 = vpop.f32.mrf.mxu0
    %2948 = vdwg.mxu0
    %v2949 = vtanh.pop %v2944
    %v2950 = vld [vmem:[%s7 + $0xb] sm:$0x1]
    %v2952 = vlaneseq
    %v2953 = vshrl.u32 %v2952, 7
    %v2954 = vsub.s32 0, %v2953
    %v2955 = vrot.slane %v2950, %v2954
    %v2957 = vmul.f32 %v2949, %v2955
    %vm2958 = vcmask 517120
    %v2959 = vsel %vm2958, %v2957, 0.0
    %2960 = vadd.xlane.f32.xlu0 %v2959
    %v2961 = vpop.xlane.xlu0 %2960
    %v2962 = vld [vmem:[%s7 + $0xc] sm:$0x1]
    %v2964 = vlaneseq
    %v2965 = vshrl.u32 %v2964, 7
    %v2966 = vsub.s32 0, %v2965
    %v2967 = vrot.slane %v2962, %v2966
    %v2969 = vadd.f32 %v2961, %v2967
    %v2970 = vxor.u32 %v2969, 2147483648
    %v2971 = vmul.f32 %v2970, 1.442695
    %v2972 = vpow.pop %v2971
    %v2973 = vadd.f32 %v2972, 1.0
    %v2974 = vrcp.pop %v2973
    %v2975 = vmul.f32 1.0, %v2974
    %vm2976 = vcmp.ge.f32.partialorder %v2975, 0.5
    %v2977 = vsel %vm2976, 1, 0
    %v2978 = vcvt.s32.f32 %v2977
    %v2979 = vpack.c.bf16 %v2949, %v2949
    %v2980 = vld [vmem:[%s5] sm:$0xf]
    %v2981 = vld [vmem:[%s5 + $0x4] sm:$0xf]
    %v2982 = vld [vmem:[%s5 + $0x8] sm:$0xf]
    %v2983 = vld [vmem:[%s5 + $0xc] sm:$0xf]
    %v2984 = vld [vmem:[%s5 + $0x10] sm:$0xf]
    %v2985 = vld [vmem:[%s5 + $0x14] sm:$0xf]
    %v2986 = vld [vmem:[%s5 + $0x18] sm:$0xf]
    %v2987 = vld [vmem:[%s5 + $0x1c] sm:$0xf]
    %v2988 = vld [vmem:[%s7 + $0xd] sm:$0x1]
    %v2990 = vlaneseq
    %v2991 = vshrl.u32 %v2990, 7
    %v2992 = vsub.s32 0, %v2991
    %v2993 = vrot.slane %v2988, %v2992
    %v3003 = vunpack.c.l.b16 %v2980
    %v3004 = vunpack.c.l.b16 %v2981
    %v3005 = vunpack.c.l.b16 %v2982
    %v3006 = vunpack.c.l.b16 %v2983
    %v3007 = vunpack.c.l.b16 %v2984
    %v3008 = vunpack.c.l.b16 %v2985
    %v3009 = vunpack.c.l.b16 %v2986
    %v3010 = vunpack.c.l.b16 %v2987
    %v3011 = vpack.c.b16 %v3004, %v3003
    %v3012 = vpack.c.b16 %v3006, %v3005
    %v3013 = vpack.c.b16 %v3008, %v3007
    %v3014 = vpack.c.b16 %v3010, %v3009
    %vm3019 = vcmask 523264
    %v3021 = vsel %vm3019, %v2979, 0
    %3023 = vmatprep.subr.bf16.mxu0 0
    %3024 = vmatpush1.bf16.msra.mxu0 0
    %3025 = vmatprep.subr.bf16.mxu0 0
    %3026 = vmatpush1.bf16.msra.mxu0 0
    %3027 = vmatprep.subr.bf16.mxu0 0
    %3028 = vmatpush1.bf16.msra.mxu0 0
    %3029 = vmatprep.subr.bf16.mxu0 0
    %3030 = vmatpush1.bf16.msra.mxu0 0
    %3031 = vmatprep.subr.bf16.mxu0 0
    %3032 = vmatpush1.bf16.msra.mxu0 %v3014
    %3033 = vmatprep.subr.bf16.mxu0 0
    %3034 = vmatpush1.bf16.msra.mxu0 %v3013
    %3035 = vmatprep.subr.bf16.mxu0 0
    %3036 = vmatpush1.bf16.msra.mxu0 %v3012
    %3037 = vmatprep.subr.bf16.mxu0 0
    %3038 = vmatpush1.bf16.msra.mxu0 %v3011
    %3039 = vmatprep.subr.bf16.mxu0 0
    %3040 = vmatpush2.bf16.msra.mxu0 0
    %3041 = vmatprep.subr.bf16.mxu0 0
    %3042 = vmatpush2.bf16.msra.mxu0 0
    %3043 = vmatprep.subr.bf16.mxu0 0
    %3044 = vmatpush2.bf16.msra.mxu0 0
    %3045 = vmatprep.subr.bf16.mxu0 0
    %3046 = vmatpush2.bf16.msra.mxu0 0
    %3047 = vmatprep.subr.bf16.mxu0 0
    %3048 = vmatpush2.bf16.msra.mxu0 0
    %3049 = vmatprep.subr.bf16.mxu0 0
    %3050 = vmatpush2.bf16.msra.mxu0 0
    %3051 = vmatprep.subr.bf16.mxu0 0
    %3052 = vmatpush2.bf16.msra.mxu0 0
    %3053 = vmatprep.subr.bf16.mxu0 0
    %3054 = vmatpush2.bf16.msra.mxu0 0
    %3055 = vmatprep.mubr.bf16.mxu0 0
    %3056 = vmatmul.mubr.bf16.gmra.mxu0 %v3021
    %v3057 = vpop.f32.mrf.mxu0
    %v3058 = vadd.f32 %v2993, %v3057
    %v3059 = vpop.f32.mrf.mxu0
    %v3060 = vpop.f32.mrf.mxu0
    %v3061 = vpop.f32.mrf.mxu0
    %3062 = vdwg.mxu0
    %v3063 = vtanh.pop %v3058
    %v3064 = vpack.c.bf16 %v3063, %v3063
    %v3065 = vld [vmem:[%s6] sm:$0xf]
    %v3066 = vld [vmem:[%s6 + $0x4] sm:$0xf]
    %v3067 = vld [vmem:[%s6 + $0x8] sm:$0xf]
    %v3068 = vld [vmem:[%s6 + $0xc] sm:$0xf]
    %v3069 = vld [vmem:[%s7 + $0xe] sm:$0x1]
    %v3071 = vlaneseq
    %v3072 = vshrl.u32 %v3071, 7
    %v3073 = vsub.s32 0, %v3072
    %v3074 = vrot.slane %v3069, %v3073
    %v3080 = vunpack.c.l.b16 %v3065
    %v3081 = vunpack.c.l.b16 %v3066
    %v3082 = vunpack.c.l.b16 %v3067
    %v3083 = vunpack.c.l.b16 %v3068
    %v3084 = vpack.c.b16 %v3081, %v3080
    %v3085 = vpack.c.b16 %v3083, %v3082
    %vm3088 = vcmask 261120
    %v3090 = vsel %vm3088, %v3064, 0
    %3092 = vmatprep.subr.bf16.mxu0 0
    %3093 = vmatpush1.bf16.msra.mxu0 0
    %3094 = vmatprep.subr.bf16.mxu0 0
    %3095 = vmatpush1.bf16.msra.mxu0 0
    %3096 = vmatprep.subr.bf16.mxu0 0
    %3097 = vmatpush1.bf16.msra.mxu0 0
    %3098 = vmatprep.subr.bf16.mxu0 0
    %3099 = vmatpush1.bf16.msra.mxu0 0
    %3100 = vmatprep.subr.bf16.mxu0 0
    %3101 = vmatpush1.bf16.msra.mxu0 0
    %3102 = vmatprep.subr.bf16.mxu0 0
    %3103 = vmatpush1.bf16.msra.mxu0 0
    %3104 = vmatprep.subr.bf16.mxu0 0
    %3105 = vmatpush1.bf16.msra.mxu0 %v3085
    %3106 = vmatprep.subr.bf16.mxu0 0
    %3107 = vmatpush1.bf16.msra.mxu0 %v3084
    %3108 = vmatprep.subr.bf16.mxu0 0
    %3109 = vmatpush2.bf16.msra.mxu0 0
    %3110 = vmatprep.subr.bf16.mxu0 0
    %3111 = vmatpush2.bf16.msra.mxu0 0
    %3112 = vmatprep.subr.bf16.mxu0 0
    %3113 = vmatpush2.bf16.msra.mxu0 0
    %3114 = vmatprep.subr.bf16.mxu0 0
    %3115 = vmatpush2.bf16.msra.mxu0 0
    %3116 = vmatprep.subr.bf16.mxu0 0
    %3117 = vmatpush2.bf16.msra.mxu0 0
    %3118 = vmatprep.subr.bf16.mxu0 0
    %3119 = vmatpush2.bf16.msra.mxu0 0
    %3120 = vmatprep.subr.bf16.mxu0 0
    %3121 = vmatpush2.bf16.msra.mxu0 0
    %3122 = vmatprep.subr.bf16.mxu0 0
    %3123 = vmatpush2.bf16.msra.mxu0 0
    %3124 = vmatprep.mubr.bf16.mxu0 0
    %3125 = vmatmul.mubr.bf16.gmra.mxu0 %v3090
    %v3126 = vpop.f32.mrf.mxu0
    %v3127 = vadd.f32 %v3074, %v3126
    %v3128 = vpop.f32.mrf.mxu0
    %v3129 = vpop.f32.mrf.mxu0
    %v3130 = vpop.f32.mrf.mxu0
    %3131 = vdwg.mxu0
    %vm3132 = vcmask 33792
    %v3133 = vsel %vm3132, %v3127, -inf
    %3134 = vmax.xlane.f32.xlu0 %v3133
    %v3135 = vpop.xlane.xlu0 %3134
    %v3136 = vsub.f32 %v3127, %v3135
    %v3137 = vmul.f32 %v3136, 1.442695
    %v3138 = vpow.pop %v3137
    %v3139 = vsel %vm3132, %v3138, 0.0
    %3140 = vadd.xlane.f32.xlu0 %v3139
    %v3141 = vpop.xlane.xlu0 %3140
    %v3142 = vrcp.pop %v3141
    %v3143 = vmul.f32 %v3138, %v3142
    %v3144 = vlaneseq
    %v3145 = vshrl.u32 %v3144, 7
    %v3146 = vsub.s32 %v2536, %v3145
    %v3147 = vrot.slane %v2608, %v3146
    %v3148 = vlaneseq
    %v3149 = vshrl.u32 %v3148, 7
    %v3150 = vsub.s32 %v2536, %v3149
    %v3151 = vrot.slane %v2613, %v3150
    %v3152 = vsel %vm2545, %v3151, %v3147
    %3154 = vst.msk [vmem:[#allocation2] sm:$0x3] %vm2548, %v3152
    %3156 = vrot.lane.b32.xlu0 %v2978, 1
    %v3157 = vpop.permute.xlu0 %3156
    %3160 = vrot.lane.b32.xlu0 %v3143, 2
    %v3161 = vpop.permute.xlu0 %3160
    %vm3163 = vcmask 7168
    %v3164 = vsel %vm3163, %v2975, %v3157
    %vm3165 = vcmask 15360
    %v3166 = vsel %vm3165, %v3164, %v3161
    %vm3167 = vcmask 56320
    %v3168 = vsel %vm3167, %v3166, 0.0
    %3169 = vst.msk [vmem:[%s9] sm:$0x3] %vm2548, %v3168
    // Predicated region
    $region34: #{gated_attention_forward.1} parent=1 // pred_check
      _
    $region35: #{gated_attention_forward.1} parent=1 // pred_check_branch
      %3171 = sbr.rel (0) target = $region37
    $region36: #{gated_attention_forward.1} parent=1 // pred_region
      %s3173 = ssub.s32 32, 32
      %3174 = vsyncadd [#allocation3], %s3173
      %s3176 = sshll.u32 [#allocation2], 4
      %s3177 = int_to_ptr.vmem [resolvable:$true] %s3176
      %3179 = dma.vmem_to_hbm [thread:$0]  %s3177, 32, %s8, [#allocation3]
    $region37: #{gated_attention_forward.1} parent=1 // pred_fallthru
      _
    // Predicated region
    $region38: #{gated_attention_forward.1} parent=1 // pred_check
      _
    $region39: #{gated_attention_forward.1} parent=1 // pred_check_branch
      %3181 = sbr.rel (0) target = $region41
    $region40: #{gated_attention_forward.1} parent=1 // pred_region
      _
    $region41: #{gated_attention_forward.1} parent=1 // pred_fallthru
      _
    // Predicated region
    $region42: #{gated_attention_forward.1} parent=1 // pred_check
      _
    $region43: #{gated_attention_forward.1} parent=1 // pred_check_branch
      %3183 = sbr.rel (0) target = $region45
    $region44: #{gated_attention_forward.1} parent=1 // pred_region
      %3184 = dma.done [#allocation3], 32
    $region45: #{gated_attention_forward.1} parent=1 // pred_fallthru
      _
    // Predicated region
    $region46: #{gated_attention_forward.1} parent=1 // pred_check
      _
    $region47: #{gated_attention_forward.1} parent=1 // pred_check_branch
      %3186 = sbr.rel (0) target = $region49
    $region48: #{gated_attention_forward.1} parent=1 // pred_region
      _
    $region49: #{gated_attention_forward.1} parent=1 // pred_fallthru
      _
    %3187 = vsyncpa [#allocation3], 1

</llo_original>
